<compile_context>
chip_gen: v6e
topology: v6e:2x2x1
jax: 0.10.0
libtpu: 0.0.40
codegen_flags: <defaults>
</compile_context>

<pallas_src>
import jax
import jax.numpy as jnp
from jax.experimental import pallas as pl
from jax.experimental.pallas import tpu as pltpu


def mlp_kernel(x_ref, w1_ref, b1_ref, w2_ref, b2_ref, o_ref):
    # fc1: [tB, in] @ [in, h] -> [tB, h], bf16 MXU inputs, f32 accumulate.
    x = x_ref[...].astype(jnp.bfloat16)
    h = jnp.dot(x, w1_ref[...], preferred_element_type=jnp.float32)
    h = jax.nn.sigmoid(h + b1_ref[...])                 # bias add + sigmoid in f32 (EUP)
    # fc2: [tB, h] @ [h, out] -> [tB, out]
    o = jnp.dot(h.astype(jnp.bfloat16), w2_ref[...], preferred_element_type=jnp.float32)
    o_ref[...] = (o + b2_ref[...]).astype(o_ref.dtype)


def neuralnet_forward(x, w1, b1_2d, w2, b2_2d, *, batch_tile=8):
    """sigmoid(x @ w1 + b1) @ w2 + b2.

    x:     [B, in_size] f32 (B multiple of batch_tile)
    w1:    [in_size, h_pad] bf16   (pre-transposed, hidden dim zero-padded)
    b1_2d: [1, h_pad] f32
    w2:    [h_pad, out_size] bf16
    b2_2d: [1, out_size] f32
    """
    B, in_size = x.shape
    h_dim = w1.shape[1]
    out_size = w2.shape[1]
    assert B % batch_tile == 0, "B must be a multiple of batch_tile"
    num_tiles = B // batch_tile

    flops = 2 * B * (in_size * h_dim + h_dim * out_size)
    bytes_accessed = (x.size * x.dtype.itemsize
                      + w1.size * w1.dtype.itemsize      # fetched once (constant block)
                      + w2.size * w2.dtype.itemsize
                      + b1_2d.size * 4 + b2_2d.size * 4
                      + B * out_size * 4)

    return pl.pallas_call(
        mlp_kernel,
        out_shape=jax.ShapeDtypeStruct((B, out_size), jnp.float32),
        grid=(num_tiles,),
        in_specs=[
            pl.BlockSpec((batch_tile, in_size), lambda i: (i, 0)),   # x: tiled over batch
            pl.BlockSpec((in_size, h_dim), lambda i: (0, 0)),        # w1: resident across tiles
            pl.BlockSpec((1, h_dim), lambda i: (0, 0)),              # b1: resident
            pl.BlockSpec((h_dim, out_size), lambda i: (0, 0)),       # w2: resident
            pl.BlockSpec((1, out_size), lambda i: (0, 0)),           # b2: resident
        ],
        out_specs=pl.BlockSpec((batch_tile, out_size), lambda i: (i, 0)),
        cost_estimate=pl.CostEstimate(
            flops=flops,
            transcendentals=B * h_dim,
            bytes_accessed=bytes_accessed,
        ),
        compiler_params=pltpu.CompilerParams(
            dimension_semantics=("parallel",),           # v7x: split batch tiles across 2 TCs
            vmem_limit_bytes=32 * 1024 * 1024,
        ),
    )(x, w1, b1_2d, w2, b2_2d)


def init_params(key, in_size=2883, h=150, out_size=4, h_pad=256):
    """nn.Linear-style init (uniform +-1/sqrt(fan_in)).

    Kernel params are produced directly in their final form (one-time cost):
      * pre-transposed [K, N] layout (no per-call / in-kernel transpose),
      * hidden dim zero-padded h -> h_pad (lane-aligned intermediate; padded
        sigmoid lanes meet zero w2 rows so they contribute nothing),
      * weights in bf16, biases already reshaped to (1, N) f32.
    Also returns the unpadded f32 params for the PyTorch-semantics reference.
    """
    k1, k2, k3, k4 = jax.random.split(key, 4)
    bound1 = 1.0 / jnp.sqrt(in_size)
    bound2 = 1.0 / jnp.sqrt(h)
    w1 = jax.random.uniform(k1, (in_size, h), jnp.float32, -bound1, bound1)
    b1 = jax.random.uniform(k2, (h,), jnp.float32, -bound1, bound1)
    w2 = jax.random.uniform(k3, (h, out_size), jnp.float32, -bound2, bound2)
    b2 = jax.random.uniform(k4, (out_size,), jnp.float32, -bound2, bound2)

    w1_p = jnp.zeros((in_size, h_pad), jnp.bfloat16).at[:, :h].set(w1.astype(jnp.bfloat16))
    b1_p = jnp.zeros((1, h_pad), jnp.float32).at[0, :h].set(b1)
    w2_p = jnp.zeros((h_pad, out_size), jnp.bfloat16).at[:h, :].set(w2.astype(jnp.bfloat16))
    b2_p = b2.reshape(1, out_size)
    return (w1_p, b1_p, w2_p, b2_p), (w1, b1, w2, b2)


def reference_forward_matched(x, w1_p, b1_p, w2_p, b2_p):
    """Pure-JAX reference with the same numerics as the kernel (bf16 MXU, f32 acc)."""
    h = jnp.dot(x.astype(jnp.bfloat16), w1_p, preferred_element_type=jnp.float32) + b1_p
    h = jax.nn.sigmoid(h)
    return jnp.dot(h.astype(jnp.bfloat16), w2_p, preferred_element_type=jnp.float32) + b2_p


def reference_forward_f32(x, w1, b1, w2, b2):
    """Full-f32 reference (PyTorch-semantics sanity check; weights already [K, N])."""
    h = jax.nn.sigmoid(x @ w1 + b1)
    return h @ w2 + b2


if __name__ == "__main__":
    key = jax.random.PRNGKey(0)
    kx, kp = jax.random.split(key)

    B, in_size, h, out_size = 16, 2883, 150, 4
    x = jax.random.normal(kx, (B, in_size), jnp.float32)
    (w1_p, b1_p, w2_p, b2_p), (w1, b1, w2, b2) = init_params(kp, in_size, h, out_size)

    out = jax.block_until_ready(neuralnet_forward(x, w1_p, b1_p, w2_p, b2_p, batch_tile=8))
    assert out.shape == (B, out_size)

    # Tight check against a reference with identical numerics (bf16 MXU, f32 acc).
    ref_matched = reference_forward_matched(x, w1_p, b1_p, w2_p, b2_p)
    assert jnp.allclose(out, ref_matched, atol=5e-3, rtol=5e-3), "mismatch vs matched reference"

    # Loose check against the full-f32 PyTorch-semantics forward (bf16 rounding slack).
    ref_f32 = reference_forward_f32(x, w1, b1, w2, b2)
    assert jnp.allclose(out, ref_f32, atol=5e-2, rtol=5e-2), "mismatch vs f32 reference"

    print("KERNEL_OK")
</pallas_src>

<mosaic_0001>
module attributes {stable_mosaic.version = 11 : i64} {
  func.func @mlp_kernel(%arg0: i32, %arg1: memref<8x2883xf32, #tpu.memory_space<vmem>>, %arg2: memref<2883x256xbf16, #tpu.memory_space<vmem>>, %arg3: memref<1x256xf32, #tpu.memory_space<vmem>>, %arg4: memref<256x4xbf16, #tpu.memory_space<vmem>>, %arg5: memref<1x4xf32, #tpu.memory_space<vmem>>, %arg6: memref<8x4xf32, #tpu.memory_space<vmem>>) attributes {dimension_semantics = [#tpu.dimension_semantics<parallel>], iteration_bounds = array<i64: 2>, scalar_prefetch = 0 : i64, scratch_operands = 0 : i64, tpu.core_type = #tpu.core_type<tc>, window_params = [{transform_indices = @transform_0, window_bounds = array<i64: 8, 2883>}, {pipeline_mode = #tpu.pipeline_mode<synchronous>, transform_indices = @transform_1, window_bounds = array<i64: 2883, 256>}, {pipeline_mode = #tpu.pipeline_mode<synchronous>, transform_indices = @transform_2, window_bounds = array<i64: 1, 256>}, {pipeline_mode = #tpu.pipeline_mode<synchronous>, transform_indices = @transform_3, window_bounds = array<i64: 256, 4>}, {pipeline_mode = #tpu.pipeline_mode<synchronous>, transform_indices = @transform_4, window_bounds = array<i64: 1, 4>}, {transform_indices = @transform_5, window_bounds = array<i64: 8, 4>}]} {
    %c0 = arith.constant 0 : index
    %c0_0 = arith.constant 0 : index
    %0 = vector.load %arg1[%c0, %c0_0] : memref<8x2883xf32, #tpu.memory_space<vmem>>, vector<8x2883xf32>
    %1 = arith.truncf %0 : vector<8x2883xf32> to vector<8x2883xbf16>
    %c0_1 = arith.constant 0 : index
    %c0_2 = arith.constant 0 : index
    %2 = vector.load %arg2[%c0_1, %c0_2] : memref<2883x256xbf16, #tpu.memory_space<vmem>>, vector<2883x256xbf16>
    %cst = arith.constant dense<0.000000e+00> : vector<8x256xf32>
    %3 = tpu.matmul %1, %2, %cst {dimension_numbers = #tpu.dot_dimension_numbers<[1], [0], [0], [1], [0, 0, 1, 1], [], []>} : vector<8x2883xbf16>, vector<2883x256xbf16>, vector<8x256xf32> -> vector<8x256xf32>
    %c0_3 = arith.constant 0 : index
    %c0_4 = arith.constant 0 : index
    %4 = vector.load %arg3[%c0_3, %c0_4] : memref<1x256xf32, #tpu.memory_space<vmem>>, vector<1x256xf32>
    %5 = vector.broadcast %4 : vector<1x256xf32> to vector<8x256xf32>
    %6 = arith.addf %3, %5 : vector<8x256xf32>
    %7 = arith.negf %6 : vector<8x256xf32>
    %8 = math.exp %7 : vector<8x256xf32>
    %cst_5 = arith.constant 1.000000e+00 : f32
    %9 = vector.broadcast %cst_5 : f32 to vector<8x256xf32>
    %10 = arith.addf %9, %8 : vector<8x256xf32>
    %11 = arith.divf %9, %10 : vector<8x256xf32>
    %12 = arith.truncf %11 : vector<8x256xf32> to vector<8x256xbf16>
    %c0_6 = arith.constant 0 : index
    %c0_7 = arith.constant 0 : index
    %13 = vector.load %arg4[%c0_6, %c0_7] : memref<256x4xbf16, #tpu.memory_space<vmem>>, vector<256x4xbf16>
    %cst_8 = arith.constant dense<0.000000e+00> : vector<8x4xf32>
    %14 = tpu.matmul %12, %13, %cst_8 {dimension_numbers = #tpu.dot_dimension_numbers<[1], [0], [0], [1], [0, 0, 1, 1], [], []>} : vector<8x256xbf16>, vector<256x4xbf16>, vector<8x4xf32> -> vector<8x4xf32>
    %c0_9 = arith.constant 0 : index
    %c0_10 = arith.constant 0 : index
    %15 = vector.load %arg5[%c0_9, %c0_10] : memref<1x4xf32, #tpu.memory_space<vmem>>, vector<1x4xf32>
    %16 = vector.broadcast %15 : vector<1x4xf32> to vector<8x4xf32>
    %17 = arith.addf %14, %16 : vector<8x4xf32>
    %c0_11 = arith.constant 0 : index
    %c0_12 = arith.constant 0 : index
    %18 = vector.load %arg6[%c0_11, %c0_12] : memref<8x4xf32, #tpu.memory_space<vmem>>, vector<8x4xf32>
    tpu.vector_store %arg6[%c0_11, %c0_12], %17 {strides = array<i32>} : memref<8x4xf32, #tpu.memory_space<vmem>>, vector<8x4xf32>,
    return
  }
  func.func @transform_0(%arg0: i32) -> (i32, i32) {
    %c0_i32 = arith.constant 0 : i32
    %c0_i32_0 = arith.constant 0 : i32
    return %arg0, %c0_i32 : i32, i32
  }
  func.func @transform_1(%arg0: i32) -> (i32, i32) {
    %c0_i32 = arith.constant 0 : i32
    %c0_i32_0 = arith.constant 0 : i32
    %c0_i32_1 = arith.constant 0 : i32
    return %c0_i32, %c0_i32_0 : i32, i32
  }
  func.func @transform_2(%arg0: i32) -> (i32, i32) {
    %c0_i32 = arith.constant 0 : i32
    %c0_i32_0 = arith.constant 0 : i32
    %c0_i32_1 = arith.constant 0 : i32
    return %c0_i32, %c0_i32_0 : i32, i32
  }
  func.func @transform_3(%arg0: i32) -> (i32, i32) {
    %c0_i32 = arith.constant 0 : i32
    %c0_i32_0 = arith.constant 0 : i32
    %c0_i32_1 = arith.constant 0 : i32
    return %c0_i32, %c0_i32_0 : i32, i32
  }
  func.func @transform_4(%arg0: i32) -> (i32, i32) {
    %c0_i32 = arith.constant 0 : i32
    %c0_i32_0 = arith.constant 0 : i32
    %c0_i32_1 = arith.constant 0 : i32
    return %c0_i32, %c0_i32_0 : i32, i32
  }
  func.func @transform_5(%arg0: i32) -> (i32, i32) {
    %c0_i32 = arith.constant 0 : i32
    %c0_i32_0 = arith.constant 0 : i32
    return %arg0, %c0_i32 : i32, i32
  }
}

</mosaic_0001>

<llo_original>
// kernel: tpu_custom_call.1
$region0: #{tpu_custom_call.1}
  #allocation0 [shape = 'u32[]', space=smem, size = 0x4, offset = 0x4, fixed_abs, tag = 'smem constant byte address 0x4 - core index']
  #allocation1 [shape = 'u32[144,128]{1,0:T(1,128)}', space=vmem, size = 0x12000, scoped, tag = 'internal scratch']
  %s0 = inlined_call_operand.hbm [shape: f32[16,2883], index: 0, kind: input, shape index: {}]
  %s1 = inlined_call_operand.hbm [shape: bf16[2883,256], index: 1, kind: input, shape index: {}]
  %s2 = inlined_call_operand.hbm [shape: f32[1,256], index: 2, kind: input, shape index: {}]
  %s3 = inlined_call_operand.vmem [shape: bf16[256,4], index: 3, kind: input, shape index: {}]
  %s4 = inlined_call_operand.hbm [shape: f32[1,4], index: 4, kind: input, shape index: {}]
  %s5 = inlined_call_operand.vmem [shape: f32[16,4], index: 5, kind: output, shape index: {}]
  %s6 = sld [smem:[#allocation0]]
  $region69: #{tpu_custom_call.1} parent=0
    _
  %s8 = ssub.s32 1, %s6
  %s9 = scalar_select 0, %s8, %s6
  $region1: #{tpu_custom_call.1} parent=0
    #allocation2 [shape = 'u8[188416]{0}', space=vmem, size = 0x2e000, scoped, tag = 'input window, operand 0']
    #allocation3 [shape = 's32[2]{0}', space=sflag, size = 0x8, scoped, tag = 'scoped memory for tpu_custom_call.1']
    #allocation4 [shape = 'u8[1478656]{0}', space=vmem, size = 0x169000, scoped, tag = 'input window, operand 1, single buffered']
    #allocation5 [shape = 's32[1]{0}', space=sflag, size = 0x4, scoped, tag = 'scoped memory for tpu_custom_call.1']
    #allocation6 [shape = 'u8[1024]{0}', space=vmem, size = 0x400, scoped, tag = 'input window, operand 2, single buffered']
    #allocation7 [shape = 'u8[512]{0}', space=vmem, size = 0x400, scoped, tag = 'input window, operand 4, single buffered']
    #allocation8 [shape = 's32[1]{0}', space=sflag, size = 0x4, scoped, tag = 'scoped memory for tpu_custom_call.1']
    %10 = vsyncpa [#allocation3], 0
    %s11 = scalar_lea.sflag [#allocation3], 1
    %12 = vsyncpa %s11, 0
    %13 = vsyncpa [#allocation5], 0
    %14 = vsyncpa [#allocation8], 0
    loop: start=0, step=1, limit=4
    $region2: #{tpu_custom_call.1} parent=1 // loop_pre_header
      _
    $region3: #{tpu_custom_call.1} parent=1 // loop_header
      %s16 = sphi 0, %s20
      %p17 = scmp.ge.s32.totalorder %s16, 4
      %s26 = sphi 0, %s28
      %s29 = sphi 0, %s26
      %s30 = sphi 0, %s29
      %s46 = sphi 0, %s30
      %s50 = sphi 0, %s50
      %s52 = sphi 0, %s50
      %s53 = sphi 0, %s52
      %s67 = sphi 0, %s53
      %s71 = sphi 0, %s71
      %s73 = sphi 0, %s71
      %s74 = sphi 0, %s73
      %s88 = sphi 0, %s74
      %s92 = sphi 0, %s92
      %s94 = sphi 0, %s92
      %s95 = sphi 0, %s94
      %s109 = sphi 0, %s95
      %s113 = sphi 0, %s113
      %s115 = sphi 0, %s113
      %s116 = sphi 0, %s115
      %s130 = sphi 0, %s116
      %s136 = sphi 0, %s138
      %s139 = sphi 0, %s136
      %s140 = sphi 0, %s139
      %s156 = sphi 0, %s140
    $region4: #{tpu_custom_call.1} parent=1 // loop_header_branch
      %19 = sbr.rel (%p17) target = $region8
    $region5: #{tpu_custom_call.1} parent=1 // loop_body
      %s21 = ssub.s32 %s16, 1
      %s22 = ssub.s32 %s16, 2
      %s23 = sadd.s32 %s16, 1
      %s24 = ssub.s32 %s16, %s23
      %p25 = scmp.eq.s32.totalorder %s24, 0
      %s27 = sadd.s32 %s26, 1
      %s28 = scalar_select %p25, %s26, %s27
      %p31 = pneg %p25
      %p32 = scmp.eq.s32.totalorder %s16, 1
      %p33 = por %p31, %p32
      %p34 = scmp.ne.s32.totalorder %s26, %s29
      %p35 = scmp.eq.s32.totalorder %s16, 0
      %p36 = por %p34, %p35
      %p37 = scmp.ne.s32.totalorder %s26, %s29
      %p38 = scmp.eq.s32.totalorder %s21, 1
      %p39 = por %p37, %p38
      %p40 = scmp.ne.s32.totalorder %s29, %s30
      %p41 = scmp.eq.s32.totalorder %s21, 0
      %p42 = por %p40, %p41
      %p43 = scmp.ne.s32.totalorder %s29, %s30
      %p44 = scmp.eq.s32.totalorder %s22, 1
      %p45 = por %p43, %p44
      %p47 = scmp.ne.s32.totalorder %s30, %s46
      %p48 = scmp.eq.s32.totalorder %s22, 0
      %p49 = por %p47, %p48
      %s51 = sadd.s32 %s50, 1
      %p54 = scmp.eq.s32.totalorder %s16, 1
      %p55 = scmp.ne.s32.totalorder %s50, %s52
      %p56 = scmp.eq.s32.totalorder %s16, 0
      %p57 = por %p55, %p56
      %p58 = scmp.ne.s32.totalorder %s50, %s52
      %p59 = scmp.eq.s32.totalorder %s21, 1
      %p60 = por %p58, %p59
      %p61 = scmp.ne.s32.totalorder %s52, %s53
      %p62 = scmp.eq.s32.totalorder %s21, 0
      %p63 = por %p61, %p62
      %p64 = scmp.ne.s32.totalorder %s52, %s53
      %p65 = scmp.eq.s32.totalorder %s22, 1
      %p66 = por %p64, %p65
      %p68 = scmp.ne.s32.totalorder %s53, %s67
      %p69 = scmp.eq.s32.totalorder %s22, 0
      %p70 = por %p68, %p69
      %s72 = sadd.s32 %s71, 1
      %p75 = scmp.eq.s32.totalorder %s16, 1
      %p76 = scmp.ne.s32.totalorder %s71, %s73
      %p77 = scmp.eq.s32.totalorder %s16, 0
      %p78 = por %p76, %p77
      %p79 = scmp.ne.s32.totalorder %s71, %s73
      %p80 = scmp.eq.s32.totalorder %s21, 1
      %p81 = por %p79, %p80
      %p82 = scmp.ne.s32.totalorder %s73, %s74
      %p83 = scmp.eq.s32.totalorder %s21, 0
      %p84 = por %p82, %p83
      %p85 = scmp.ne.s32.totalorder %s73, %s74
      %p86 = scmp.eq.s32.totalorder %s22, 1
      %p87 = por %p85, %p86
      %p89 = scmp.ne.s32.totalorder %s74, %s88
      %p90 = scmp.eq.s32.totalorder %s22, 0
      %p91 = por %p89, %p90
      %s93 = sadd.s32 %s92, 1
      %p96 = scmp.eq.s32.totalorder %s16, 1
      %p97 = scmp.ne.s32.totalorder %s92, %s94
      %p98 = scmp.eq.s32.totalorder %s16, 0
      %p99 = por %p97, %p98
      %p100 = scmp.ne.s32.totalorder %s92, %s94
      %p101 = scmp.eq.s32.totalorder %s21, 1
      %p102 = por %p100, %p101
      %p103 = scmp.ne.s32.totalorder %s94, %s95
      %p104 = scmp.eq.s32.totalorder %s21, 0
      %p105 = por %p103, %p104
      %p106 = scmp.ne.s32.totalorder %s94, %s95
      %p107 = scmp.eq.s32.totalorder %s22, 1
      %p108 = por %p106, %p107
      %p110 = scmp.ne.s32.totalorder %s95, %s109
      %p111 = scmp.eq.s32.totalorder %s22, 0
      %p112 = por %p110, %p111
      %s114 = sadd.s32 %s113, 1
      %p117 = scmp.eq.s32.totalorder %s16, 1
      %p118 = scmp.ne.s32.totalorder %s113, %s115
      %p119 = scmp.eq.s32.totalorder %s16, 0
      %p120 = por %p118, %p119
      %p121 = scmp.ne.s32.totalorder %s113, %s115
      %p122 = scmp.eq.s32.totalorder %s21, 1
      %p123 = por %p121, %p122
      %p124 = scmp.ne.s32.totalorder %s115, %s116
      %p125 = scmp.eq.s32.totalorder %s21, 0
      %p126 = por %p124, %p125
      %p127 = scmp.ne.s32.totalorder %s115, %s116
      %p128 = scmp.eq.s32.totalorder %s22, 1
      %p129 = por %p127, %p128
      %p131 = scmp.ne.s32.totalorder %s116, %s130
      %p132 = scmp.eq.s32.totalorder %s22, 0
      %p133 = por %p131, %p132
      %s134 = ssub.s32 %s16, %s23
      %p135 = scmp.eq.s32.totalorder %s134, 0
      %s137 = sadd.s32 %s136, 1
      %s138 = scalar_select %p135, %s136, %s137
      %p141 = pneg %p135
      %p142 = scmp.eq.s32.totalorder %s16, 1
      %p143 = por %p141, %p142
      %p144 = scmp.ne.s32.totalorder %s136, %s139
      %p145 = scmp.eq.s32.totalorder %s16, 0
      %p146 = por %p144, %p145
      %p147 = scmp.ne.s32.totalorder %s136, %s139
      %p148 = scmp.eq.s32.totalorder %s21, 1
      %p149 = por %p147, %p148
      %p150 = scmp.ne.s32.totalorder %s139, %s140
      %p151 = scmp.eq.s32.totalorder %s21, 0
      %p152 = por %p150, %p151
      %p153 = scmp.ne.s32.totalorder %s139, %s140
      %p154 = scmp.eq.s32.totalorder %s22, 1
      %p155 = por %p153, %p154
      %p157 = scmp.ne.s32.totalorder %s140, %s156
      %p158 = scmp.eq.s32.totalorder %s22, 0
      %p159 = por %p157, %p158
      %p160 = scmp.le.s32.totalorder 1, %s16
      %p161 = scmp.lt.s32.totalorder %s16, 3
      %p162 = pnand %p160, %p161
      %p163 = pneg %p162
      // Predicated region
      $region9: #{tpu_custom_call.1} parent=5 // pred_check
        _
      $region10: #{tpu_custom_call.1} parent=5 // pred_check_branch
        %165 = sbr.rel (%p162) target = $region12
      $region11: #{tpu_custom_call.1} parent=5 // pred_region
        %s166 = ssub.s32 %s16, 1
        // Predicated region
        $region13: #{tpu_custom_call.1} parent=11 // pred_check
          %p167 = pneg %p63
        $region14: #{tpu_custom_call.1} parent=11 // pred_check_branch
          %169 = sbr.rel (%p167) target = $region16
        $region15: #{tpu_custom_call.1} parent=11 // pred_region
          %s171 = ssub.s32 46208, 46208
          %172 = vsyncadd [#allocation5], %s171
          %s173 = sshll.u32 [#allocation4], 4
          %s174 = int_to_ptr.vmem [resolvable:$true] %s173
          %179 = dma.hbm_to_vmem [thread:$0]  %s1, 46208, %s174, [#allocation5], 128, 128, 8
        $region16: #{tpu_custom_call.1} parent=11 // pred_fallthru
          _
        // Predicated region
        $region17: #{tpu_custom_call.1} parent=11 // pred_check
          %p180 = pneg %p84
        $region18: #{tpu_custom_call.1} parent=11 // pred_check_branch
          %182 = sbr.rel (%p180) target = $region20
        $region19: #{tpu_custom_call.1} parent=11 // pred_region
          %s184 = ssub.s32 32, 32
          %185 = vsyncadd [#allocation5], %s184
          %s187 = sshll.u32 [#allocation6], 4
          %s188 = int_to_ptr.vmem [resolvable:$true] %s187
          %190 = dma.hbm_to_vmem [thread:$0]  %s2, 32, %s188, [#allocation5]
        $region20: #{tpu_custom_call.1} parent=11 // pred_fallthru
          _
        // Predicated region
        $region21: #{tpu_custom_call.1} parent=11 // pred_check
          %p191 = pneg %p105
        $region22: #{tpu_custom_call.1} parent=11 // pred_check_branch
          %193 = sbr.rel (%p191) target = $region24
        $region23: #{tpu_custom_call.1} parent=11 // pred_region
          _
        $region24: #{tpu_custom_call.1} parent=11 // pred_fallthru
          _
        // Predicated region
        $region25: #{tpu_custom_call.1} parent=11 // pred_check
          %p194 = pneg %p126
        $region26: #{tpu_custom_call.1} parent=11 // pred_check_branch
          %196 = sbr.rel (%p194) target = $region28
        $region27: #{tpu_custom_call.1} parent=11 // pred_region
          %s198 = ssub.s32 16, 16
          %199 = vsyncadd [#allocation8], %s198
          %s201 = sshll.u32 [#allocation7], 4
          %s202 = int_to_ptr.vmem [resolvable:$true] %s201
          %204 = dma.hbm_to_vmem [thread:$0]  %s4, 16, %s202, [#allocation8]
        $region28: #{tpu_custom_call.1} parent=11 // pred_fallthru
          _
      $region12: #{tpu_custom_call.1} parent=5 // pred_fallthru
        _
      %p205 = scmp.lt.s32.totalorder %s16, 2
      // Predicated region
      $region29: #{tpu_custom_call.1} parent=5 // pred_check
        %p206 = pneg %p205
      $region30: #{tpu_custom_call.1} parent=5 // pred_check_branch
        %208 = sbr.rel (%p206) target = $region32
      $region31: #{tpu_custom_call.1} parent=5 // pred_region
        // Predicated region
        $region33: #{tpu_custom_call.1} parent=31 // pred_check
          %p209 = pneg %p36
        $region34: #{tpu_custom_call.1} parent=31 // pred_check_branch
          %211 = sbr.rel (%p209) target = $region36
        $region35: #{tpu_custom_call.1} parent=31 // pred_region
          %s212 = sand.u32 %s26, 1
          %s213 = scalar_lea.sflag [#allocation3], %s212
          %s214 = sand.u32 %s26, 1
          %s215 = smul.addr %s214, 184
          %s216 = scalar_lea.vmem [#allocation2], %s215
          %s218 = ssub.s32 2944, 2944
          %219 = vsyncadd %s213, %s218
          %s220 = smul.addr %s16, 23
          %s221 = smul.addr %s220, 128
          %s222 = scalar_lea.hbm %s0, %s221
          %s224 = sshll.u32 %s216, 4
          %s225 = int_to_ptr.vmem [resolvable:$true] %s224
          %227 = dma.hbm_to_vmem [thread:$0]  %s222, 2944, %s225, %s213
        $region36: #{tpu_custom_call.1} parent=31 // pred_fallthru
          _
      $region32: #{tpu_custom_call.1} parent=5 // pred_fallthru
        _
      %p228 = scmp.le.s32.totalorder 1, %s16
      %p229 = scmp.lt.s32.totalorder %s16, 3
      %p230 = pnand %p228, %p229
      %p231 = pneg %p230
      // Predicated region
      $region37: #{tpu_custom_call.1} parent=5 // pred_check
        _
      $region38: #{tpu_custom_call.1} parent=5 // pred_check_branch
        %233 = sbr.rel (%p230) target = $region40
      $region39: #{tpu_custom_call.1} parent=5 // pred_region
        %s234 = ssub.s32 %s16, 1
        %s235 = sand.u32 %s29, 1
        %s236 = scalar_lea.sflag [#allocation3], %s235
        %s237 = sand.u32 %s29, 1
        %s238 = smul.addr %s237, 184
        %s239 = scalar_lea.vmem [#allocation2], %s238
        // Predicated region
        $region41: #{tpu_custom_call.1} parent=39 // pred_check
          %p240 = pneg %p42
        $region42: #{tpu_custom_call.1} parent=39 // pred_check_branch
          %242 = sbr.rel (%p240) target = $region44
        $region43: #{tpu_custom_call.1} parent=39 // pred_region
          %243 = dma.done %s236, 2944
        $region44: #{tpu_custom_call.1} parent=39 // pred_fallthru
          _
        // Predicated region
        $region45: #{tpu_custom_call.1} parent=39 // pred_check
          %p244 = pneg %p63
        $region46: #{tpu_custom_call.1} parent=39 // pred_check_branch
          %246 = sbr.rel (%p244) target = $region48
        $region47: #{tpu_custom_call.1} parent=39 // pred_region
          %247 = dma.done [#allocation5], 46208
        $region48: #{tpu_custom_call.1} parent=39 // pred_fallthru
          _
        // Predicated region
        $region49: #{tpu_custom_call.1} parent=39 // pred_check
          %p248 = pneg %p84
        $region50: #{tpu_custom_call.1} parent=39 // pred_check_branch
          %250 = sbr.rel (%p248) target = $region52
        $region51: #{tpu_custom_call.1} parent=39 // pred_region
          %251 = dma.done [#allocation5], 32
        $region52: #{tpu_custom_call.1} parent=39 // pred_fallthru
          _
        // Predicated region
        $region53: #{tpu_custom_call.1} parent=39 // pred_check
          %p252 = pneg %p126
        $region54: #{tpu_custom_call.1} parent=39 // pred_check_branch
          %254 = sbr.rel (%p252) target = $region56
        $region55: #{tpu_custom_call.1} parent=39 // pred_region
          %255 = dma.done [#allocation8], 16
        $region56: #{tpu_custom_call.1} parent=39 // pred_fallthru
          _
        %s256 = sand.u32 %s29, 1
        %s257 = scalar_lea.sflag [#allocation3], %s256
        %s258 = sand.u32 %s29, 1
        %s259 = smul.addr %s258, 184
        %s260 = scalar_lea.vmem [#allocation2], %s259
        %p261 = pneg %p42
        %p262 = pneg %p39
        %p263 = pneg %p63
        %p264 = pneg %p60
        %p265 = pneg %p84
        %p266 = pneg %p81
        %p267 = pneg %p105
        %p268 = pneg %p102
        %p269 = pneg %p126
        %p270 = pneg %p123
        %p271 = pneg %p152
        %p272 = pneg %p149
        %p273 = scmp.lt.s32.totalorder %s21, 1
        %s274 = scalar_select %p273, %s21, 1
        %s275 = smul.addr %s274, 8
        %s276 = scalar_lea.vmem %s5, %s275
        %p277 = scmp.lt.s32.totalorder %s21, 1
        %s278 = scalar_select %p277, %s21, 1
        %s279 = smul.addr %s278, 8
        %s280 = scalar_lea.vmem %s5, %s279
        %v282 = vld [vmem:[%s239] sm:$0xff]
        %v283 = vld [vmem:[%s239 + $0x8] sm:$0xff]
        %v284 = vld [vmem:[%s239 + $0x10] sm:$0xff]
        %v285 = vld [vmem:[%s239 + $0x18] sm:$0xff]
        %v286 = vld [vmem:[%s239 + $0x20] sm:$0xff]
        %v287 = vld [vmem:[%s239 + $0x28] sm:$0xff]
        %v288 = vld [vmem:[%s239 + $0x30] sm:$0xff]
        %v289 = vld [vmem:[%s239 + $0x38] sm:$0xff]
        %v290 = vld [vmem:[%s239 + $0x40] sm:$0xff]
        %v291 = vld [vmem:[%s239 + $0x48] sm:$0xff]
        %v292 = vld [vmem:[%s239 + $0x50] sm:$0xff]
        %v293 = vld [vmem:[%s239 + $0x58] sm:$0xff]
        %v294 = vld [vmem:[%s239 + $0x60] sm:$0xff]
        %v295 = vld [vmem:[%s239 + $0x68] sm:$0xff]
        %v296 = vld [vmem:[%s239 + $0x70] sm:$0xff]
        %v297 = vld [vmem:[%s239 + $0x78] sm:$0xff]
        %v298 = vld [vmem:[%s239 + $0x80] sm:$0xff]
        %v299 = vld [vmem:[%s239 + $0x88] sm:$0xff]
        %v300 = vld [vmem:[%s239 + $0x90] sm:$0xff]
        %v301 = vld [vmem:[%s239 + $0x98] sm:$0xff]
        %v302 = vld [vmem:[%s239 + $0xa0] sm:$0xff]
        %v303 = vld [vmem:[%s239 + $0xa8] sm:$0xff]
        %v304 = vld [vmem:[%s239 + $0xb0] sm:$0xff]
        %v305 = vpack.c.bf16 %v282, %v282
        %v306 = vpack.c.bf16 %v283, %v283
        %v307 = vpack.c.bf16 %v284, %v284
        %v308 = vpack.c.bf16 %v285, %v285
        %v309 = vpack.c.bf16 %v286, %v286
        %v310 = vpack.c.bf16 %v287, %v287
        %v311 = vpack.c.bf16 %v288, %v288
        %v312 = vpack.c.bf16 %v289, %v289
        %v313 = vpack.c.bf16 %v290, %v290
        %v314 = vpack.c.bf16 %v291, %v291
        %v315 = vpack.c.bf16 %v292, %v292
        %v316 = vpack.c.bf16 %v293, %v293
        %v317 = vpack.c.bf16 %v294, %v294
        %v318 = vpack.c.bf16 %v295, %v295
        %v319 = vpack.c.bf16 %v296, %v296
        %v320 = vpack.c.bf16 %v297, %v297
        %v321 = vpack.c.bf16 %v298, %v298
        %v322 = vpack.c.bf16 %v299, %v299
        %v323 = vpack.c.bf16 %v300, %v300
        %v324 = vpack.c.bf16 %v301, %v301
        %v325 = vpack.c.bf16 %v302, %v302
        %v326 = vpack.c.bf16 %v303, %v303
        %v327 = vpack.c.bf16 %v304, %v304
        %v328 = vld [vmem:[#allocation4] sm:$0xff]
        %v329 = vld [vmem:[#allocation4 + $0x8] sm:$0xff]
        %v330 = vld [vmem:[#allocation4 + $0x10] sm:$0xff]
        %v331 = vld [vmem:[#allocation4 + $0x18] sm:$0xff]
        %v332 = vld [vmem:[#allocation4 + $0x20] sm:$0xff]
        %v333 = vld [vmem:[#allocation4 + $0x28] sm:$0xff]
        %v334 = vld [vmem:[#allocation4 + $0x30] sm:$0xff]
        %v335 = vld [vmem:[#allocation4 + $0x38] sm:$0xff]
        %v336 = vld [vmem:[#allocation4 + $0x40] sm:$0xff]
        %v337 = vld [vmem:[#allocation4 + $0x48] sm:$0xff]
        %v338 = vld [vmem:[#allocation4 + $0x50] sm:$0xff]
        %v339 = vld [vmem:[#allocation4 + $0x58] sm:$0xff]
        %v340 = vld [vmem:[#allocation4 + $0x60] sm:$0xff]
        %v341 = vld [vmem:[#allocation4 + $0x68] sm:$0xff]
        %v342 = vld [vmem:[#allocation4 + $0x70] sm:$0xff]
        %v343 = vld [vmem:[#allocation4 + $0x78] sm:$0xff]
        %v344 = vld [vmem:[#allocation4 + $0x80] sm:$0xff]
        %v345 = vld [vmem:[#allocation4 + $0x88] sm:$0xff]
        %v346 = vld [vmem:[#allocation4 + $0x90] sm:$0xff]
        %v347 = vld [vmem:[#allocation4 + $0x98] sm:$0xff]
        %v348 = vld [vmem:[#allocation4 + $0xa0] sm:$0xff]
        %v349 = vld [vmem:[#allocation4 + $0xa8] sm:$0xff]
        %v350 = vld [vmem:[#allocation4 + $0xb0] sm:$0xff]
        %v351 = vld [vmem:[#allocation4 + $0xb8] sm:$0xff]
        %v352 = vld [vmem:[#allocation4 + $0xc0] sm:$0xff]
        %v353 = vld [vmem:[#allocation4 + $0xc8] sm:$0xff]
        %v354 = vld [vmem:[#allocation4 + $0xd0] sm:$0xff]
        %v355 = vld [vmem:[#allocation4 + $0xd8] sm:$0xff]
        %v356 = vld [vmem:[#allocation4 + $0xe0] sm:$0xff]
        %v357 = vld [vmem:[#allocation4 + $0xe8] sm:$0xff]
        %v358 = vld [vmem:[#allocation4 + $0xf0] sm:$0xff]
        %v359 = vld [vmem:[#allocation4 + $0xf8] sm:$0xff]
        %v360 = vld [vmem:[#allocation4 + $0x100] sm:$0xff]
        %v361 = vld [vmem:[#allocation4 + $0x108] sm:$0xff]
        %v362 = vld [vmem:[#allocation4 + $0x110] sm:$0xff]
        %v363 = vld [vmem:[#allocation4 + $0x118] sm:$0xff]
        %v364 = vld [vmem:[#allocation4 + $0x120] sm:$0xff]
        %v365 = vld [vmem:[#allocation4 + $0x128] sm:$0xff]
        %v366 = vld [vmem:[#allocation4 + $0x130] sm:$0xff]
        %v367 = vld [vmem:[#allocation4 + $0x138] sm:$0xff]
        %v368 = vld [vmem:[#allocation4 + $0x140] sm:$0xff]
        %v369 = vld [vmem:[#allocation4 + $0x148] sm:$0xff]
        %v370 = vld [vmem:[#allocation4 + $0x150] sm:$0xff]
        %v371 = vld [vmem:[#allocation4 + $0x158] sm:$0xff]
        %v372 = vld [vmem:[#allocation4 + $0x160] sm:$0xff]
        %v373 = vld [vmem:[#allocation4 + $0x168] sm:$0xff]
        %v374 = vld [vmem:[#allocation4 + $0x170] sm:$0xff]
        %v375 = vld [vmem:[#allocation4 + $0x178] sm:$0xff]
        %v376 = vld [vmem:[#allocation4 + $0x180] sm:$0xff]
        %v377 = vld [vmem:[#allocation4 + $0x188] sm:$0xff]
        %v378 = vld [vmem:[#allocation4 + $0x190] sm:$0xff]
        %v379 = vld [vmem:[#allocation4 + $0x198] sm:$0xff]
        %v380 = vld [vmem:[#allocation4 + $0x1a0] sm:$0xff]
        %v381 = vld [vmem:[#allocation4 + $0x1a8] sm:$0xff]
        %v382 = vld [vmem:[#allocation4 + $0x1b0] sm:$0xff]
        %v383 = vld [vmem:[#allocation4 + $0x1b8] sm:$0xff]
        %v384 = vld [vmem:[#allocation4 + $0x1c0] sm:$0xff]
        %v385 = vld [vmem:[#allocation4 + $0x1c8] sm:$0xff]
        %v386 = vld [vmem:[#allocation4 + $0x1d0] sm:$0xff]
        %v387 = vld [vmem:[#allocation4 + $0x1d8] sm:$0xff]
        %v388 = vld [vmem:[#allocation4 + $0x1e0] sm:$0xff]
        %v389 = vld [vmem:[#allocation4 + $0x1e8] sm:$0xff]
        %v390 = vld [vmem:[#allocation4 + $0x1f0] sm:$0xff]
        %v391 = vld [vmem:[#allocation4 + $0x1f8] sm:$0xff]
        %v392 = vld [vmem:[#allocation4 + $0x200] sm:$0xff]
        %v393 = vld [vmem:[#allocation4 + $0x208] sm:$0xff]
        %v394 = vld [vmem:[#allocation4 + $0x210] sm:$0xff]
        %v395 = vld [vmem:[#allocation4 + $0x218] sm:$0xff]
        %v396 = vld [vmem:[#allocation4 + $0x220] sm:$0xff]
        %v397 = vld [vmem:[#allocation4 + $0x228] sm:$0xff]
        %v398 = vld [vmem:[#allocation4 + $0x230] sm:$0xff]
        %v399 = vld [vmem:[#allocation4 + $0x238] sm:$0xff]
        %v400 = vld [vmem:[#allocation4 + $0x240] sm:$0xff]
        %v401 = vld [vmem:[#allocation4 + $0x248] sm:$0xff]
        %v402 = vld [vmem:[#allocation4 + $0x250] sm:$0xff]
        %v403 = vld [vmem:[#allocation4 + $0x258] sm:$0xff]
        %v404 = vld [vmem:[#allocation4 + $0x260] sm:$0xff]
        %v405 = vld [vmem:[#allocation4 + $0x268] sm:$0xff]
        %v406 = vld [vmem:[#allocation4 + $0x270] sm:$0xff]
        %v407 = vld [vmem:[#allocation4 + $0x278] sm:$0xff]
        %v408 = vld [vmem:[#allocation4 + $0x280] sm:$0xff]
        %v409 = vld [vmem:[#allocation4 + $0x288] sm:$0xff]
        %v410 = vld [vmem:[#allocation4 + $0x290] sm:$0xff]
        %v411 = vld [vmem:[#allocation4 + $0x298] sm:$0xff]
        %v412 = vld [vmem:[#allocation4 + $0x2a0] sm:$0xff]
        %v413 = vld [vmem:[#allocation4 + $0x2a8] sm:$0xff]
        %v414 = vld [vmem:[#allocation4 + $0x2b0] sm:$0xff]
        %v415 = vld [vmem:[#allocation4 + $0x2b8] sm:$0xff]
        %v416 = vld [vmem:[#allocation4 + $0x2c0] sm:$0xff]
        %v417 = vld [vmem:[#allocation4 + $0x2c8] sm:$0xff]
        %v418 = vld [vmem:[#allocation4 + $0x2d0] sm:$0xff]
        %v419 = vld [vmem:[#allocation4 + $0x2d8] sm:$0xff]
        %v420 = vld [vmem:[#allocation4 + $0x2e0] sm:$0xff]
        %v421 = vld [vmem:[#allocation4 + $0x2e8] sm:$0xff]
        %v422 = vld [vmem:[#allocation4 + $0x2f0] sm:$0xff]
        %v423 = vld [vmem:[#allocation4 + $0x2f8] sm:$0xff]
        %v424 = vld [vmem:[#allocation4 + $0x300] sm:$0xff]
        %v425 = vld [vmem:[#allocation4 + $0x308] sm:$0xff]
        %v426 = vld [vmem:[#allocation4 + $0x310] sm:$0xff]
        %v427 = vld [vmem:[#allocation4 + $0x318] sm:$0xff]
        %v428 = vld [vmem:[#allocation4 + $0x320] sm:$0xff]
        %v429 = vld [vmem:[#allocation4 + $0x328] sm:$0xff]
        %v430 = vld [vmem:[#allocation4 + $0x330] sm:$0xff]
        %v431 = vld [vmem:[#allocation4 + $0x338] sm:$0xff]
        %v432 = vld [vmem:[#allocation4 + $0x340] sm:$0xff]
        %v433 = vld [vmem:[#allocation4 + $0x348] sm:$0xff]
        %v434 = vld [vmem:[#allocation4 + $0x350] sm:$0xff]
        %v435 = vld [vmem:[#allocation4 + $0x358] sm:$0xff]
        %v436 = vld [vmem:[#allocation4 + $0x360] sm:$0xff]
        %v437 = vld [vmem:[#allocation4 + $0x368] sm:$0xff]
        %v438 = vld [vmem:[#allocation4 + $0x370] sm:$0xff]
        %v439 = vld [vmem:[#allocation4 + $0x378] sm:$0xff]
        %v440 = vld [vmem:[#allocation4 + $0x380] sm:$0xff]
        %v441 = vld [vmem:[#allocation4 + $0x388] sm:$0xff]
        %v442 = vld [vmem:[#allocation4 + $0x390] sm:$0xff]
        %v443 = vld [vmem:[#allocation4 + $0x398] sm:$0xff]
        %v444 = vld [vmem:[#allocation4 + $0x3a0] sm:$0xff]
        %v445 = vld [vmem:[#allocation4 + $0x3a8] sm:$0xff]
        %v446 = vld [vmem:[#allocation4 + $0x3b0] sm:$0xff]
        %v447 = vld [vmem:[#allocation4 + $0x3b8] sm:$0xff]
        %v448 = vld [vmem:[#allocation4 + $0x3c0] sm:$0xff]
        %v449 = vld [vmem:[#allocation4 + $0x3c8] sm:$0xff]
        %v450 = vld [vmem:[#allocation4 + $0x3d0] sm:$0xff]
        %v451 = vld [vmem:[#allocation4 + $0x3d8] sm:$0xff]
        %v452 = vld [vmem:[#allocation4 + $0x3e0] sm:$0xff]
        %v453 = vld [vmem:[#allocation4 + $0x3e8] sm:$0xff]
        %v454 = vld [vmem:[#allocation4 + $0x3f0] sm:$0xff]
        %v455 = vld [vmem:[#allocation4 + $0x3f8] sm:$0xff]
        %v456 = vld [vmem:[#allocation4 + $0x400] sm:$0xff]
        %v457 = vld [vmem:[#allocation4 + $0x408] sm:$0xff]
        %v458 = vld [vmem:[#allocation4 + $0x410] sm:$0xff]
        %v459 = vld [vmem:[#allocation4 + $0x418] sm:$0xff]
        %v460 = vld [vmem:[#allocation4 + $0x420] sm:$0xff]
        %v461 = vld [vmem:[#allocation4 + $0x428] sm:$0xff]
        %v462 = vld [vmem:[#allocation4 + $0x430] sm:$0xff]
        %v463 = vld [vmem:[#allocation4 + $0x438] sm:$0xff]
        %v464 = vld [vmem:[#allocation4 + $0x440] sm:$0xff]
        %v465 = vld [vmem:[#allocation4 + $0x448] sm:$0xff]
        %v466 = vld [vmem:[#allocation4 + $0x450] sm:$0xff]
        %v467 = vld [vmem:[#allocation4 + $0x458] sm:$0xff]
        %v468 = vld [vmem:[#allocation4 + $0x460] sm:$0xff]
        %v469 = vld [vmem:[#allocation4 + $0x468] sm:$0xff]
        %v470 = vld [vmem:[#allocation4 + $0x470] sm:$0xff]
        %v471 = vld [vmem:[#allocation4 + $0x478] sm:$0xff]
        %v472 = vld [vmem:[#allocation4 + $0x480] sm:$0xff]
        %v473 = vld [vmem:[#allocation4 + $0x488] sm:$0xff]
        %v474 = vld [vmem:[#allocation4 + $0x490] sm:$0xff]
        %v475 = vld [vmem:[#allocation4 + $0x498] sm:$0xff]
        %v476 = vld [vmem:[#allocation4 + $0x4a0] sm:$0xff]
        %v477 = vld [vmem:[#allocation4 + $0x4a8] sm:$0xff]
        %v478 = vld [vmem:[#allocation4 + $0x4b0] sm:$0xff]
        %v479 = vld [vmem:[#allocation4 + $0x4b8] sm:$0xff]
        %v480 = vld [vmem:[#allocation4 + $0x4c0] sm:$0xff]
        %v481 = vld [vmem:[#allocation4 + $0x4c8] sm:$0xff]
        %v482 = vld [vmem:[#allocation4 + $0x4d0] sm:$0xff]
        %v483 = vld [vmem:[#allocation4 + $0x4d8] sm:$0xff]
        %v484 = vld [vmem:[#allocation4 + $0x4e0] sm:$0xff]
        %v485 = vld [vmem:[#allocation4 + $0x4e8] sm:$0xff]
        %v486 = vld [vmem:[#allocation4 + $0x4f0] sm:$0xff]
        %v487 = vld [vmem:[#allocation4 + $0x4f8] sm:$0xff]
        %v488 = vld [vmem:[#allocation4 + $0x500] sm:$0xff]
        %v489 = vld [vmem:[#allocation4 + $0x508] sm:$0xff]
        %v490 = vld [vmem:[#allocation4 + $0x510] sm:$0xff]
        %v491 = vld [vmem:[#allocation4 + $0x518] sm:$0xff]
        %v492 = vld [vmem:[#allocation4 + $0x520] sm:$0xff]
        %v493 = vld [vmem:[#allocation4 + $0x528] sm:$0xff]
        %v494 = vld [vmem:[#allocation4 + $0x530] sm:$0xff]
        %v495 = vld [vmem:[#allocation4 + $0x538] sm:$0xff]
        %v496 = vld [vmem:[#allocation4 + $0x540] sm:$0xff]
        %v497 = vld [vmem:[#allocation4 + $0x548] sm:$0xff]
        %v498 = vld [vmem:[#allocation4 + $0x550] sm:$0xff]
        %v499 = vld [vmem:[#allocation4 + $0x558] sm:$0xff]
        %v500 = vld [vmem:[#allocation4 + $0x560] sm:$0xff]
        %v501 = vld [vmem:[#allocation4 + $0x568] sm:$0xff]
        %v502 = vld [vmem:[#allocation4 + $0x570] sm:$0xff]
        %v503 = vld [vmem:[#allocation4 + $0x578] sm:$0xff]
        %v504 = vld [vmem:[#allocation4 + $0x580] sm:$0xff]
        %v505 = vld [vmem:[#allocation4 + $0x588] sm:$0xff]
        %v506 = vld [vmem:[#allocation4 + $0x590] sm:$0xff]
        %v507 = vld [vmem:[#allocation4 + $0x598] sm:$0xff]
        %v508 = vld [vmem:[#allocation4 + $0x5a0] sm:$0xff]
        %v509 = vld [vmem:[#allocation4 + $0x5a8] sm:$0xff]
        %v510 = vld [vmem:[#allocation4 + $0x5b0] sm:$0xff]
        %v511 = vld [vmem:[#allocation4 + $0x5b8] sm:$0xff]
        %v512 = vld [vmem:[#allocation4 + $0x5c0] sm:$0xff]
        %v513 = vld [vmem:[#allocation4 + $0x5c8] sm:$0xff]
        %v514 = vld [vmem:[#allocation4 + $0x5d0] sm:$0xff]
        %v515 = vld [vmem:[#allocation4 + $0x5d8] sm:$0xff]
        %v516 = vld [vmem:[#allocation4 + $0x5e0] sm:$0xff]
        %v517 = vld [vmem:[#allocation4 + $0x5e8] sm:$0xff]
        %v518 = vld [vmem:[#allocation4 + $0x5f0] sm:$0xff]
        %v519 = vld [vmem:[#allocation4 + $0x5f8] sm:$0xff]
        %v520 = vld [vmem:[#allocation4 + $0x600] sm:$0xff]
        %v521 = vld [vmem:[#allocation4 + $0x608] sm:$0xff]
        %v522 = vld [vmem:[#allocation4 + $0x610] sm:$0xff]
        %v523 = vld [vmem:[#allocation4 + $0x618] sm:$0xff]
        %v524 = vld [vmem:[#allocation4 + $0x620] sm:$0xff]
        %v525 = vld [vmem:[#allocation4 + $0x628] sm:$0xff]
        %v526 = vld [vmem:[#allocation4 + $0x630] sm:$0xff]
        %v527 = vld [vmem:[#allocation4 + $0x638] sm:$0xff]
        %v528 = vld [vmem:[#allocation4 + $0x640] sm:$0xff]
        %v529 = vld [vmem:[#allocation4 + $0x648] sm:$0xff]
        %v530 = vld [vmem:[#allocation4 + $0x650] sm:$0xff]
        %v531 = vld [vmem:[#allocation4 + $0x658] sm:$0xff]
        %v532 = vld [vmem:[#allocation4 + $0x660] sm:$0xff]
        %v533 = vld [vmem:[#allocation4 + $0x668] sm:$0xff]
        %v534 = vld [vmem:[#allocation4 + $0x670] sm:$0xff]
        %v535 = vld [vmem:[#allocation4 + $0x678] sm:$0xff]
        %v536 = vld [vmem:[#allocation4 + $0x680] sm:$0xff]
        %v537 = vld [vmem:[#allocation4 + $0x688] sm:$0xff]
        %v538 = vld [vmem:[#allocation4 + $0x690] sm:$0xff]
        %v539 = vld [vmem:[#allocation4 + $0x698] sm:$0xff]
        %v540 = vld [vmem:[#allocation4 + $0x6a0] sm:$0xff]
        %v541 = vld [vmem:[#allocation4 + $0x6a8] sm:$0xff]
        %v542 = vld [vmem:[#allocation4 + $0x6b0] sm:$0xff]
        %v543 = vld [vmem:[#allocation4 + $0x6b8] sm:$0xff]
        %v544 = vld [vmem:[#allocation4 + $0x6c0] sm:$0xff]
        %v545 = vld [vmem:[#allocation4 + $0x6c8] sm:$0xff]
        %v546 = vld [vmem:[#allocation4 + $0x6d0] sm:$0xff]
        %v547 = vld [vmem:[#allocation4 + $0x6d8] sm:$0xff]
        %v548 = vld [vmem:[#allocation4 + $0x6e0] sm:$0xff]
        %v549 = vld [vmem:[#allocation4 + $0x6e8] sm:$0xff]
        %v550 = vld [vmem:[#allocation4 + $0x6f0] sm:$0xff]
        %v551 = vld [vmem:[#allocation4 + $0x6f8] sm:$0xff]
        %v552 = vld [vmem:[#allocation4 + $0x700] sm:$0xff]
        %v553 = vld [vmem:[#allocation4 + $0x708] sm:$0xff]
        %v554 = vld [vmem:[#allocation4 + $0x710] sm:$0xff]
        %v555 = vld [vmem:[#allocation4 + $0x718] sm:$0xff]
        %v556 = vld [vmem:[#allocation4 + $0x720] sm:$0xff]
        %v557 = vld [vmem:[#allocation4 + $0x728] sm:$0xff]
        %v558 = vld [vmem:[#allocation4 + $0x730] sm:$0xff]
        %v559 = vld [vmem:[#allocation4 + $0x738] sm:$0xff]
        %v560 = vld [vmem:[#allocation4 + $0x740] sm:$0xff]
        %v561 = vld [vmem:[#allocation4 + $0x748] sm:$0xff]
        %v562 = vld [vmem:[#allocation4 + $0x750] sm:$0xff]
        %v563 = vld [vmem:[#allocation4 + $0x758] sm:$0xff]
        %v564 = vld [vmem:[#allocation4 + $0x760] sm:$0xff]
        %v565 = vld [vmem:[#allocation4 + $0x768] sm:$0xff]
        %v566 = vld [vmem:[#allocation4 + $0x770] sm:$0xff]
        %v567 = vld [vmem:[#allocation4 + $0x778] sm:$0xff]
        %v568 = vld [vmem:[#allocation4 + $0x780] sm:$0xff]
        %v569 = vld [vmem:[#allocation4 + $0x788] sm:$0xff]
        %v570 = vld [vmem:[#allocation4 + $0x790] sm:$0xff]
        %v571 = vld [vmem:[#allocation4 + $0x798] sm:$0xff]
        %v572 = vld [vmem:[#allocation4 + $0x7a0] sm:$0xff]
        %v573 = vld [vmem:[#allocation4 + $0x7a8] sm:$0xff]
        %v574 = vld [vmem:[#allocation4 + $0x7b0] sm:$0xff]
        %v575 = vld [vmem:[#allocation4 + $0x7b8] sm:$0xff]
        %v576 = vld [vmem:[#allocation4 + $0x7c0] sm:$0xff]
        %v577 = vld [vmem:[#allocation4 + $0x7c8] sm:$0xff]
        %v578 = vld [vmem:[#allocation4 + $0x7d0] sm:$0xff]
        %v579 = vld [vmem:[#allocation4 + $0x7d8] sm:$0xff]
        %v580 = vld [vmem:[#allocation4 + $0x7e0] sm:$0xff]
        %v581 = vld [vmem:[#allocation4 + $0x7e8] sm:$0xff]
        %v582 = vld [vmem:[#allocation4 + $0x7f0] sm:$0xff]
        %v583 = vld [vmem:[#allocation4 + $0x7f8] sm:$0xff]
        %v584 = vld [vmem:[#allocation4 + $0x800] sm:$0xff]
        %v585 = vld [vmem:[#allocation4 + $0x808] sm:$0xff]
        %v586 = vld [vmem:[#allocation4 + $0x810] sm:$0xff]
        %v587 = vld [vmem:[#allocation4 + $0x818] sm:$0xff]
        %v588 = vld [vmem:[#allocation4 + $0x820] sm:$0xff]
        %v589 = vld [vmem:[#allocation4 + $0x828] sm:$0xff]
        %v590 = vld [vmem:[#allocation4 + $0x830] sm:$0xff]
        %v591 = vld [vmem:[#allocation4 + $0x838] sm:$0xff]
        %v592 = vld [vmem:[#allocation4 + $0x840] sm:$0xff]
        %v593 = vld [vmem:[#allocation4 + $0x848] sm:$0xff]
        %v594 = vld [vmem:[#allocation4 + $0x850] sm:$0xff]
        %v595 = vld [vmem:[#allocation4 + $0x858] sm:$0xff]
        %v596 = vld [vmem:[#allocation4 + $0x860] sm:$0xff]
        %v597 = vld [vmem:[#allocation4 + $0x868] sm:$0xff]
        %v598 = vld [vmem:[#allocation4 + $0x870] sm:$0xff]
        %v599 = vld [vmem:[#allocation4 + $0x878] sm:$0xff]
        %v600 = vld [vmem:[#allocation4 + $0x880] sm:$0xff]
        %v601 = vld [vmem:[#allocation4 + $0x888] sm:$0xff]
        %v602 = vld [vmem:[#allocation4 + $0x890] sm:$0xff]
        %v603 = vld [vmem:[#allocation4 + $0x898] sm:$0xff]
        %v604 = vld [vmem:[#allocation4 + $0x8a0] sm:$0xff]
        %v605 = vld [vmem:[#allocation4 + $0x8a8] sm:$0xff]
        %v606 = vld [vmem:[#allocation4 + $0x8b0] sm:$0xff]
        %v607 = vld [vmem:[#allocation4 + $0x8b8] sm:$0xff]
        %v608 = vld [vmem:[#allocation4 + $0x8c0] sm:$0xff]
        %v609 = vld [vmem:[#allocation4 + $0x8c8] sm:$0xff]
        %v610 = vld [vmem:[#allocation4 + $0x8d0] sm:$0xff]
        %v611 = vld [vmem:[#allocation4 + $0x8d8] sm:$0xff]
        %v612 = vld [vmem:[#allocation4 + $0x8e0] sm:$0xff]
        %v613 = vld [vmem:[#allocation4 + $0x8e8] sm:$0xff]
        %v614 = vld [vmem:[#allocation4 + $0x8f0] sm:$0xff]
        %v615 = vld [vmem:[#allocation4 + $0x8f8] sm:$0xff]
        %v616 = vld [vmem:[#allocation4 + $0x900] sm:$0xff]
        %v617 = vld [vmem:[#allocation4 + $0x908] sm:$0xff]
        %v618 = vld [vmem:[#allocation4 + $0x910] sm:$0xff]
        %v619 = vld [vmem:[#allocation4 + $0x918] sm:$0xff]
        %v620 = vld [vmem:[#allocation4 + $0x920] sm:$0xff]
        %v621 = vld [vmem:[#allocation4 + $0x928] sm:$0xff]
        %v622 = vld [vmem:[#allocation4 + $0x930] sm:$0xff]
        %v623 = vld [vmem:[#allocation4 + $0x938] sm:$0xff]
        %v624 = vld [vmem:[#allocation4 + $0x940] sm:$0xff]
        %v625 = vld [vmem:[#allocation4 + $0x948] sm:$0xff]
        %v626 = vld [vmem:[#allocation4 + $0x950] sm:$0xff]
        %v627 = vld [vmem:[#allocation4 + $0x958] sm:$0xff]
        %v628 = vld [vmem:[#allocation4 + $0x960] sm:$0xff]
        %v629 = vld [vmem:[#allocation4 + $0x968] sm:$0xff]
        %v630 = vld [vmem:[#allocation4 + $0x970] sm:$0xff]
        %v631 = vld [vmem:[#allocation4 + $0x978] sm:$0xff]
        %v632 = vld [vmem:[#allocation4 + $0x980] sm:$0xff]
        %v633 = vld [vmem:[#allocation4 + $0x988] sm:$0xff]
        %v634 = vld [vmem:[#allocation4 + $0x990] sm:$0xff]
        %v635 = vld [vmem:[#allocation4 + $0x998] sm:$0xff]
        %v636 = vld [vmem:[#allocation4 + $0x9a0] sm:$0xff]
        %v637 = vld [vmem:[#allocation4 + $0x9a8] sm:$0xff]
        %v638 = vld [vmem:[#allocation4 + $0x9b0] sm:$0xff]
        %v639 = vld [vmem:[#allocation4 + $0x9b8] sm:$0xff]
        %v640 = vld [vmem:[#allocation4 + $0x9c0] sm:$0xff]
        %v641 = vld [vmem:[#allocation4 + $0x9c8] sm:$0xff]
        %v642 = vld [vmem:[#allocation4 + $0x9d0] sm:$0xff]
        %v643 = vld [vmem:[#allocation4 + $0x9d8] sm:$0xff]
        %v644 = vld [vmem:[#allocation4 + $0x9e0] sm:$0xff]
        %v645 = vld [vmem:[#allocation4 + $0x9e8] sm:$0xff]
        %v646 = vld [vmem:[#allocation4 + $0x9f0] sm:$0xff]
        %v647 = vld [vmem:[#allocation4 + $0x9f8] sm:$0xff]
        %v648 = vld [vmem:[#allocation4 + $0xa00] sm:$0xff]
        %v649 = vld [vmem:[#allocation4 + $0xa08] sm:$0xff]
        %v650 = vld [vmem:[#allocation4 + $0xa10] sm:$0xff]
        %v651 = vld [vmem:[#allocation4 + $0xa18] sm:$0xff]
        %v652 = vld [vmem:[#allocation4 + $0xa20] sm:$0xff]
        %v653 = vld [vmem:[#allocation4 + $0xa28] sm:$0xff]
        %v654 = vld [vmem:[#allocation4 + $0xa30] sm:$0xff]
        %v655 = vld [vmem:[#allocation4 + $0xa38] sm:$0xff]
        %v656 = vld [vmem:[#allocation4 + $0xa40] sm:$0xff]
        %v657 = vld [vmem:[#allocation4 + $0xa48] sm:$0xff]
        %v658 = vld [vmem:[#allocation4 + $0xa50] sm:$0xff]
        %v659 = vld [vmem:[#allocation4 + $0xa58] sm:$0xff]
        %v660 = vld [vmem:[#allocation4 + $0xa60] sm:$0xff]
        %v661 = vld [vmem:[#allocation4 + $0xa68] sm:$0xff]
        %v662 = vld [vmem:[#allocation4 + $0xa70] sm:$0xff]
        %v663 = vld [vmem:[#allocation4 + $0xa78] sm:$0xff]
        %v664 = vld [vmem:[#allocation4 + $0xa80] sm:$0xff]
        %v665 = vld [vmem:[#allocation4 + $0xa88] sm:$0xff]
        %v666 = vld [vmem:[#allocation4 + $0xa90] sm:$0xff]
        %v667 = vld [vmem:[#allocation4 + $0xa98] sm:$0xff]
        %v668 = vld [vmem:[#allocation4 + $0xaa0] sm:$0xff]
        %v669 = vld [vmem:[#allocation4 + $0xaa8] sm:$0xff]
        %v670 = vld [vmem:[#allocation4 + $0xab0] sm:$0xff]
        %v671 = vld [vmem:[#allocation4 + $0xab8] sm:$0xff]
        %v672 = vld [vmem:[#allocation4 + $0xac0] sm:$0xff]
        %v673 = vld [vmem:[#allocation4 + $0xac8] sm:$0xff]
        %v674 = vld [vmem:[#allocation4 + $0xad0] sm:$0xff]
        %v675 = vld [vmem:[#allocation4 + $0xad8] sm:$0xff]
        %v676 = vld [vmem:[#allocation4 + $0xae0] sm:$0xff]
        %v677 = vld [vmem:[#allocation4 + $0xae8] sm:$0xff]
        %v678 = vld [vmem:[#allocation4 + $0xaf0] sm:$0xff]
        %v679 = vld [vmem:[#allocation4 + $0xaf8] sm:$0xff]
        %v680 = vld [vmem:[#allocation4 + $0xb00] sm:$0xff]
        %v681 = vld [vmem:[#allocation4 + $0xb08] sm:$0xff]
        %v682 = vld [vmem:[#allocation4 + $0xb10] sm:$0xff]
        %v683 = vld [vmem:[#allocation4 + $0xb18] sm:$0xff]
        %v684 = vld [vmem:[#allocation4 + $0xb20] sm:$0xff]
        %v685 = vld [vmem:[#allocation4 + $0xb28] sm:$0xff]
        %v686 = vld [vmem:[#allocation4 + $0xb30] sm:$0xff]
        %v687 = vld [vmem:[#allocation4 + $0xb38] sm:$0xff]
        %v688 = vld [vmem:[#allocation4 + $0xb40] sm:$0x33]
        %v689 = vld [vmem:[#allocation6] sm:$0x3]
        %v691 = vlaneseq
        %v692 = vshrl.u32 %v691, 7
        %v693 = vsub.s32 0, %v692
        %v694 = vrot.slane %v689, %v693
        %v695 = vlaneseq
        %v696 = vshrl.u32 %v695, 7
        %v697 = vsub.s32 1, %v696
        %v698 = vrot.slane %v689, %v697
        %v1062 = vunpack.c.l.b16 %v328
        %v1063 = vunpack.c.h.b16 %v328
        %v1064 = vunpack.c.l.b16 %v329
        %v1065 = vunpack.c.h.b16 %v329
        %v1066 = vunpack.c.l.b16 %v330
        %v1067 = vunpack.c.h.b16 %v330
        %v1068 = vunpack.c.l.b16 %v331
        %v1069 = vunpack.c.h.b16 %v331
        %v1070 = vunpack.c.l.b16 %v332
        %v1071 = vunpack.c.h.b16 %v332
        %v1072 = vunpack.c.l.b16 %v333
        %v1073 = vunpack.c.h.b16 %v333
        %v1074 = vunpack.c.l.b16 %v334
        %v1075 = vunpack.c.h.b16 %v334
        %v1076 = vunpack.c.l.b16 %v335
        %v1077 = vunpack.c.h.b16 %v335
        %v1078 = vunpack.c.l.b16 %v336
        %v1079 = vunpack.c.h.b16 %v336
        %v1080 = vunpack.c.l.b16 %v337
        %v1081 = vunpack.c.h.b16 %v337
        %v1082 = vunpack.c.l.b16 %v338
        %v1083 = vunpack.c.h.b16 %v338
        %v1084 = vunpack.c.l.b16 %v339
        %v1085 = vunpack.c.h.b16 %v339
        %v1086 = vunpack.c.l.b16 %v340
        %v1087 = vunpack.c.h.b16 %v340
        %v1088 = vunpack.c.l.b16 %v341
        %v1089 = vunpack.c.h.b16 %v341
        %v1090 = vunpack.c.l.b16 %v342
        %v1091 = vunpack.c.h.b16 %v342
        %v1092 = vunpack.c.l.b16 %v343
        %v1093 = vunpack.c.h.b16 %v343
        %v1094 = vunpack.c.l.b16 %v344
        %v1095 = vunpack.c.h.b16 %v344
        %v1096 = vunpack.c.l.b16 %v345
        %v1097 = vunpack.c.h.b16 %v345
        %v1098 = vunpack.c.l.b16 %v346
        %v1099 = vunpack.c.h.b16 %v346
        %v1100 = vunpack.c.l.b16 %v347
        %v1101 = vunpack.c.h.b16 %v347
        %v1102 = vunpack.c.l.b16 %v348
        %v1103 = vunpack.c.h.b16 %v348
        %v1104 = vunpack.c.l.b16 %v349
        %v1105 = vunpack.c.h.b16 %v349
        %v1106 = vunpack.c.l.b16 %v350
        %v1107 = vunpack.c.h.b16 %v350
        %v1108 = vunpack.c.l.b16 %v351
        %v1109 = vunpack.c.h.b16 %v351
        %v1110 = vunpack.c.l.b16 %v352
        %v1111 = vunpack.c.h.b16 %v352
        %v1112 = vunpack.c.l.b16 %v353
        %v1113 = vunpack.c.h.b16 %v353
        %v1114 = vunpack.c.l.b16 %v354
        %v1115 = vunpack.c.h.b16 %v354
        %v1116 = vunpack.c.l.b16 %v355
        %v1117 = vunpack.c.h.b16 %v355
        %v1118 = vunpack.c.l.b16 %v356
        %v1119 = vunpack.c.h.b16 %v356
        %v1120 = vunpack.c.l.b16 %v357
        %v1121 = vunpack.c.h.b16 %v357
        %v1122 = vunpack.c.l.b16 %v358
        %v1123 = vunpack.c.h.b16 %v358
        %v1124 = vunpack.c.l.b16 %v359
        %v1125 = vunpack.c.h.b16 %v359
        %v1126 = vunpack.c.l.b16 %v360
        %v1127 = vunpack.c.h.b16 %v360
        %v1128 = vunpack.c.l.b16 %v361
        %v1129 = vunpack.c.h.b16 %v361
        %v1130 = vunpack.c.l.b16 %v362
        %v1131 = vunpack.c.h.b16 %v362
        %v1132 = vunpack.c.l.b16 %v363
        %v1133 = vunpack.c.h.b16 %v363
        %v1134 = vunpack.c.l.b16 %v364
        %v1135 = vunpack.c.h.b16 %v364
        %v1136 = vunpack.c.l.b16 %v365
        %v1137 = vunpack.c.h.b16 %v365
        %v1138 = vunpack.c.l.b16 %v366
        %v1139 = vunpack.c.h.b16 %v366
        %v1140 = vunpack.c.l.b16 %v367
        %v1141 = vunpack.c.h.b16 %v367
        %v1142 = vunpack.c.l.b16 %v368
        %v1143 = vunpack.c.h.b16 %v368
        %v1144 = vunpack.c.l.b16 %v369
        %v1145 = vunpack.c.h.b16 %v369
        %v1146 = vunpack.c.l.b16 %v370
        %v1147 = vunpack.c.h.b16 %v370
        %v1148 = vunpack.c.l.b16 %v371
        %v1149 = vunpack.c.h.b16 %v371
        %v1150 = vunpack.c.l.b16 %v372
        %v1151 = vunpack.c.h.b16 %v372
        %v1152 = vunpack.c.l.b16 %v373
        %v1153 = vunpack.c.h.b16 %v373
        %v1154 = vunpack.c.l.b16 %v374
        %v1155 = vunpack.c.h.b16 %v374
        %v1156 = vunpack.c.l.b16 %v375
        %v1157 = vunpack.c.h.b16 %v375
        %v1158 = vunpack.c.l.b16 %v376
        %v1159 = vunpack.c.h.b16 %v376
        %v1160 = vunpack.c.l.b16 %v377
        %v1161 = vunpack.c.h.b16 %v377
        %v1162 = vunpack.c.l.b16 %v378
        %v1163 = vunpack.c.h.b16 %v378
        %v1164 = vunpack.c.l.b16 %v379
        %v1165 = vunpack.c.h.b16 %v379
        %v1166 = vunpack.c.l.b16 %v380
        %v1167 = vunpack.c.h.b16 %v380
        %v1168 = vunpack.c.l.b16 %v381
        %v1169 = vunpack.c.h.b16 %v381
        %v1170 = vunpack.c.l.b16 %v382
        %v1171 = vunpack.c.h.b16 %v382
        %v1172 = vunpack.c.l.b16 %v383
        %v1173 = vunpack.c.h.b16 %v383
        %v1174 = vunpack.c.l.b16 %v384
        %v1175 = vunpack.c.h.b16 %v384
        %v1176 = vunpack.c.l.b16 %v385
        %v1177 = vunpack.c.h.b16 %v385
        %v1178 = vunpack.c.l.b16 %v386
        %v1179 = vunpack.c.h.b16 %v386
        %v1180 = vunpack.c.l.b16 %v387
        %v1181 = vunpack.c.h.b16 %v387
        %v1182 = vunpack.c.l.b16 %v388
        %v1183 = vunpack.c.h.b16 %v388
        %v1184 = vunpack.c.l.b16 %v389
        %v1185 = vunpack.c.h.b16 %v389
        %v1186 = vunpack.c.l.b16 %v390
        %v1187 = vunpack.c.h.b16 %v390
        %v1188 = vunpack.c.l.b16 %v391
        %v1189 = vunpack.c.h.b16 %v391
        %v1190 = vunpack.c.l.b16 %v392
        %v1191 = vunpack.c.h.b16 %v392
        %v1192 = vunpack.c.l.b16 %v393
        %v1193 = vunpack.c.h.b16 %v393
        %v1194 = vunpack.c.l.b16 %v394
        %v1195 = vunpack.c.h.b16 %v394
        %v1196 = vunpack.c.l.b16 %v395
        %v1197 = vunpack.c.h.b16 %v395
        %v1198 = vunpack.c.l.b16 %v396
        %v1199 = vunpack.c.h.b16 %v396
        %v1200 = vunpack.c.l.b16 %v397
        %v1201 = vunpack.c.h.b16 %v397
        %v1202 = vunpack.c.l.b16 %v398
        %v1203 = vunpack.c.h.b16 %v398
        %v1204 = vunpack.c.l.b16 %v399
        %v1205 = vunpack.c.h.b16 %v399
        %v1206 = vunpack.c.l.b16 %v400
        %v1207 = vunpack.c.h.b16 %v400
        %v1208 = vunpack.c.l.b16 %v401
        %v1209 = vunpack.c.h.b16 %v401
        %v1210 = vunpack.c.l.b16 %v402
        %v1211 = vunpack.c.h.b16 %v402
        %v1212 = vunpack.c.l.b16 %v403
        %v1213 = vunpack.c.h.b16 %v403
        %v1214 = vunpack.c.l.b16 %v404
        %v1215 = vunpack.c.h.b16 %v404
        %v1216 = vunpack.c.l.b16 %v405
        %v1217 = vunpack.c.h.b16 %v405
        %v1218 = vunpack.c.l.b16 %v406
        %v1219 = vunpack.c.h.b16 %v406
        %v1220 = vunpack.c.l.b16 %v407
        %v1221 = vunpack.c.h.b16 %v407
        %v1222 = vunpack.c.l.b16 %v408
        %v1223 = vunpack.c.h.b16 %v408
        %v1224 = vunpack.c.l.b16 %v409
        %v1225 = vunpack.c.h.b16 %v409
        %v1226 = vunpack.c.l.b16 %v410
        %v1227 = vunpack.c.h.b16 %v410
        %v1228 = vunpack.c.l.b16 %v411
        %v1229 = vunpack.c.h.b16 %v411
        %v1230 = vunpack.c.l.b16 %v412
        %v1231 = vunpack.c.h.b16 %v412
        %v1232 = vunpack.c.l.b16 %v413
        %v1233 = vunpack.c.h.b16 %v413
        %v1234 = vunpack.c.l.b16 %v414
        %v1235 = vunpack.c.h.b16 %v414
        %v1236 = vunpack.c.l.b16 %v415
        %v1237 = vunpack.c.h.b16 %v415
        %v1238 = vunpack.c.l.b16 %v416
        %v1239 = vunpack.c.h.b16 %v416
        %v1240 = vunpack.c.l.b16 %v417
        %v1241 = vunpack.c.h.b16 %v417
        %v1242 = vunpack.c.l.b16 %v418
        %v1243 = vunpack.c.h.b16 %v418
        %v1244 = vunpack.c.l.b16 %v419
        %v1245 = vunpack.c.h.b16 %v419
        %v1246 = vunpack.c.l.b16 %v420
        %v1247 = vunpack.c.h.b16 %v420
        %v1248 = vunpack.c.l.b16 %v421
        %v1249 = vunpack.c.h.b16 %v421
        %v1250 = vunpack.c.l.b16 %v422
        %v1251 = vunpack.c.h.b16 %v422
        %v1252 = vunpack.c.l.b16 %v423
        %v1253 = vunpack.c.h.b16 %v423
        %v1254 = vunpack.c.l.b16 %v424
        %v1255 = vunpack.c.h.b16 %v424
        %v1256 = vunpack.c.l.b16 %v425
        %v1257 = vunpack.c.h.b16 %v425
        %v1258 = vunpack.c.l.b16 %v426
        %v1259 = vunpack.c.h.b16 %v426
        %v1260 = vunpack.c.l.b16 %v427
        %v1261 = vunpack.c.h.b16 %v427
        %v1262 = vunpack.c.l.b16 %v428
        %v1263 = vunpack.c.h.b16 %v428
        %v1264 = vunpack.c.l.b16 %v429
        %v1265 = vunpack.c.h.b16 %v429
        %v1266 = vunpack.c.l.b16 %v430
        %v1267 = vunpack.c.h.b16 %v430
        %v1268 = vunpack.c.l.b16 %v431
        %v1269 = vunpack.c.h.b16 %v431
        %v1270 = vunpack.c.l.b16 %v432
        %v1271 = vunpack.c.h.b16 %v432
        %v1272 = vunpack.c.l.b16 %v433
        %v1273 = vunpack.c.h.b16 %v433
        %v1274 = vunpack.c.l.b16 %v434
        %v1275 = vunpack.c.h.b16 %v434
        %v1276 = vunpack.c.l.b16 %v435
        %v1277 = vunpack.c.h.b16 %v435
        %v1278 = vunpack.c.l.b16 %v436
        %v1279 = vunpack.c.h.b16 %v436
        %v1280 = vunpack.c.l.b16 %v437
        %v1281 = vunpack.c.h.b16 %v437
        %v1282 = vunpack.c.l.b16 %v438
        %v1283 = vunpack.c.h.b16 %v438
        %v1284 = vunpack.c.l.b16 %v439
        %v1285 = vunpack.c.h.b16 %v439
        %v1286 = vunpack.c.l.b16 %v440
        %v1287 = vunpack.c.h.b16 %v440
        %v1288 = vunpack.c.l.b16 %v441
        %v1289 = vunpack.c.h.b16 %v441
        %v1290 = vunpack.c.l.b16 %v442
        %v1291 = vunpack.c.h.b16 %v442
        %v1292 = vunpack.c.l.b16 %v443
        %v1293 = vunpack.c.h.b16 %v443
        %v1294 = vunpack.c.l.b16 %v444
        %v1295 = vunpack.c.h.b16 %v444
        %v1296 = vunpack.c.l.b16 %v445
        %v1297 = vunpack.c.h.b16 %v445
        %v1298 = vunpack.c.l.b16 %v446
        %v1299 = vunpack.c.h.b16 %v446
        %v1300 = vunpack.c.l.b16 %v447
        %v1301 = vunpack.c.h.b16 %v447
        %v1302 = vunpack.c.l.b16 %v448
        %v1303 = vunpack.c.h.b16 %v448
        %v1304 = vunpack.c.l.b16 %v449
        %v1305 = vunpack.c.h.b16 %v449
        %v1306 = vunpack.c.l.b16 %v450
        %v1307 = vunpack.c.h.b16 %v450
        %v1308 = vunpack.c.l.b16 %v451
        %v1309 = vunpack.c.h.b16 %v451
        %v1310 = vunpack.c.l.b16 %v452
        %v1311 = vunpack.c.h.b16 %v452
        %v1312 = vunpack.c.l.b16 %v453
        %v1313 = vunpack.c.h.b16 %v453
        %v1314 = vunpack.c.l.b16 %v454
        %v1315 = vunpack.c.h.b16 %v454
        %v1316 = vunpack.c.l.b16 %v455
        %v1317 = vunpack.c.h.b16 %v455
        %v1318 = vunpack.c.l.b16 %v456
        %v1319 = vunpack.c.h.b16 %v456
        %v1320 = vunpack.c.l.b16 %v457
        %v1321 = vunpack.c.h.b16 %v457
        %v1322 = vunpack.c.l.b16 %v458
        %v1323 = vunpack.c.h.b16 %v458
        %v1324 = vunpack.c.l.b16 %v459
        %v1325 = vunpack.c.h.b16 %v459
        %v1326 = vunpack.c.l.b16 %v460
        %v1327 = vunpack.c.h.b16 %v460
        %v1328 = vunpack.c.l.b16 %v461
        %v1329 = vunpack.c.h.b16 %v461
        %v1330 = vunpack.c.l.b16 %v462
        %v1331 = vunpack.c.h.b16 %v462
        %v1332 = vunpack.c.l.b16 %v463
        %v1333 = vunpack.c.h.b16 %v463
        %v1334 = vunpack.c.l.b16 %v464
        %v1335 = vunpack.c.h.b16 %v464
        %v1336 = vunpack.c.l.b16 %v465
        %v1337 = vunpack.c.h.b16 %v465
        %v1338 = vunpack.c.l.b16 %v466
        %v1339 = vunpack.c.h.b16 %v466
        %v1340 = vunpack.c.l.b16 %v467
        %v1341 = vunpack.c.h.b16 %v467
        %v1342 = vunpack.c.l.b16 %v468
        %v1343 = vunpack.c.h.b16 %v468
        %v1344 = vunpack.c.l.b16 %v469
        %v1345 = vunpack.c.h.b16 %v469
        %v1346 = vunpack.c.l.b16 %v470
        %v1347 = vunpack.c.h.b16 %v470
        %v1348 = vunpack.c.l.b16 %v471
        %v1349 = vunpack.c.h.b16 %v471
        %v1350 = vunpack.c.l.b16 %v472
        %v1351 = vunpack.c.h.b16 %v472
        %v1352 = vunpack.c.l.b16 %v473
        %v1353 = vunpack.c.h.b16 %v473
        %v1354 = vunpack.c.l.b16 %v474
        %v1355 = vunpack.c.h.b16 %v474
        %v1356 = vunpack.c.l.b16 %v475
        %v1357 = vunpack.c.h.b16 %v475
        %v1358 = vunpack.c.l.b16 %v476
        %v1359 = vunpack.c.h.b16 %v476
        %v1360 = vunpack.c.l.b16 %v477
        %v1361 = vunpack.c.h.b16 %v477
        %v1362 = vunpack.c.l.b16 %v478
        %v1363 = vunpack.c.h.b16 %v478
        %v1364 = vunpack.c.l.b16 %v479
        %v1365 = vunpack.c.h.b16 %v479
        %v1366 = vunpack.c.l.b16 %v480
        %v1367 = vunpack.c.h.b16 %v480
        %v1368 = vunpack.c.l.b16 %v481
        %v1369 = vunpack.c.h.b16 %v481
        %v1370 = vunpack.c.l.b16 %v482
        %v1371 = vunpack.c.h.b16 %v482
        %v1372 = vunpack.c.l.b16 %v483
        %v1373 = vunpack.c.h.b16 %v483
        %v1374 = vunpack.c.l.b16 %v484
        %v1375 = vunpack.c.h.b16 %v484
        %v1376 = vunpack.c.l.b16 %v485
        %v1377 = vunpack.c.h.b16 %v485
        %v1378 = vunpack.c.l.b16 %v486
        %v1379 = vunpack.c.h.b16 %v486
        %v1380 = vunpack.c.l.b16 %v487
        %v1381 = vunpack.c.h.b16 %v487
        %v1382 = vunpack.c.l.b16 %v488
        %v1383 = vunpack.c.h.b16 %v488
        %v1384 = vunpack.c.l.b16 %v489
        %v1385 = vunpack.c.h.b16 %v489
        %v1386 = vunpack.c.l.b16 %v490
        %v1387 = vunpack.c.h.b16 %v490
        %v1388 = vunpack.c.l.b16 %v491
        %v1389 = vunpack.c.h.b16 %v491
        %v1390 = vunpack.c.l.b16 %v492
        %v1391 = vunpack.c.h.b16 %v492
        %v1392 = vunpack.c.l.b16 %v493
        %v1393 = vunpack.c.h.b16 %v493
        %v1394 = vunpack.c.l.b16 %v494
        %v1395 = vunpack.c.h.b16 %v494
        %v1396 = vunpack.c.l.b16 %v495
        %v1397 = vunpack.c.h.b16 %v495
        %v1398 = vunpack.c.l.b16 %v496
        %v1399 = vunpack.c.h.b16 %v496
        %v1400 = vunpack.c.l.b16 %v497
        %v1401 = vunpack.c.h.b16 %v497
        %v1402 = vunpack.c.l.b16 %v498
        %v1403 = vunpack.c.h.b16 %v498
        %v1404 = vunpack.c.l.b16 %v499
        %v1405 = vunpack.c.h.b16 %v499
        %v1406 = vunpack.c.l.b16 %v500
        %v1407 = vunpack.c.h.b16 %v500
        %v1408 = vunpack.c.l.b16 %v501
        %v1409 = vunpack.c.h.b16 %v501
        %v1410 = vunpack.c.l.b16 %v502
        %v1411 = vunpack.c.h.b16 %v502
        %v1412 = vunpack.c.l.b16 %v503
        %v1413 = vunpack.c.h.b16 %v503
        %v1414 = vunpack.c.l.b16 %v504
        %v1415 = vunpack.c.h.b16 %v504
        %v1416 = vunpack.c.l.b16 %v505
        %v1417 = vunpack.c.h.b16 %v505
        %v1418 = vunpack.c.l.b16 %v506
        %v1419 = vunpack.c.h.b16 %v506
        %v1420 = vunpack.c.l.b16 %v507
        %v1421 = vunpack.c.h.b16 %v507
        %v1422 = vunpack.c.l.b16 %v508
        %v1423 = vunpack.c.h.b16 %v508
        %v1424 = vunpack.c.l.b16 %v509
        %v1425 = vunpack.c.h.b16 %v509
        %v1426 = vunpack.c.l.b16 %v510
        %v1427 = vunpack.c.h.b16 %v510
        %v1428 = vunpack.c.l.b16 %v511
        %v1429 = vunpack.c.h.b16 %v511
        %v1430 = vunpack.c.l.b16 %v512
        %v1431 = vunpack.c.h.b16 %v512
        %v1432 = vunpack.c.l.b16 %v513
        %v1433 = vunpack.c.h.b16 %v513
        %v1434 = vunpack.c.l.b16 %v514
        %v1435 = vunpack.c.h.b16 %v514
        %v1436 = vunpack.c.l.b16 %v515
        %v1437 = vunpack.c.h.b16 %v515
        %v1438 = vunpack.c.l.b16 %v516
        %v1439 = vunpack.c.h.b16 %v516
        %v1440 = vunpack.c.l.b16 %v517
        %v1441 = vunpack.c.h.b16 %v517
        %v1442 = vunpack.c.l.b16 %v518
        %v1443 = vunpack.c.h.b16 %v518
        %v1444 = vunpack.c.l.b16 %v519
        %v1445 = vunpack.c.h.b16 %v519
        %v1446 = vunpack.c.l.b16 %v520
        %v1447 = vunpack.c.h.b16 %v520
        %v1448 = vunpack.c.l.b16 %v521
        %v1449 = vunpack.c.h.b16 %v521
        %v1450 = vunpack.c.l.b16 %v522
        %v1451 = vunpack.c.h.b16 %v522
        %v1452 = vunpack.c.l.b16 %v523
        %v1453 = vunpack.c.h.b16 %v523
        %v1454 = vunpack.c.l.b16 %v524
        %v1455 = vunpack.c.h.b16 %v524
        %v1456 = vunpack.c.l.b16 %v525
        %v1457 = vunpack.c.h.b16 %v525
        %v1458 = vunpack.c.l.b16 %v526
        %v1459 = vunpack.c.h.b16 %v526
        %v1460 = vunpack.c.l.b16 %v527
        %v1461 = vunpack.c.h.b16 %v527
        %v1462 = vunpack.c.l.b16 %v528
        %v1463 = vunpack.c.h.b16 %v528
        %v1464 = vunpack.c.l.b16 %v529
        %v1465 = vunpack.c.h.b16 %v529
        %v1466 = vunpack.c.l.b16 %v530
        %v1467 = vunpack.c.h.b16 %v530
        %v1468 = vunpack.c.l.b16 %v531
        %v1469 = vunpack.c.h.b16 %v531
        %v1470 = vunpack.c.l.b16 %v532
        %v1471 = vunpack.c.h.b16 %v532
        %v1472 = vunpack.c.l.b16 %v533
        %v1473 = vunpack.c.h.b16 %v533
        %v1474 = vunpack.c.l.b16 %v534
        %v1475 = vunpack.c.h.b16 %v534
        %v1476 = vunpack.c.l.b16 %v535
        %v1477 = vunpack.c.h.b16 %v535
        %v1478 = vunpack.c.l.b16 %v536
        %v1479 = vunpack.c.h.b16 %v536
        %v1480 = vunpack.c.l.b16 %v537
        %v1481 = vunpack.c.h.b16 %v537
        %v1482 = vunpack.c.l.b16 %v538
        %v1483 = vunpack.c.h.b16 %v538
        %v1484 = vunpack.c.l.b16 %v539
        %v1485 = vunpack.c.h.b16 %v539
        %v1486 = vunpack.c.l.b16 %v540
        %v1487 = vunpack.c.h.b16 %v540
        %v1488 = vunpack.c.l.b16 %v541
        %v1489 = vunpack.c.h.b16 %v541
        %v1490 = vunpack.c.l.b16 %v542
        %v1491 = vunpack.c.h.b16 %v542
        %v1492 = vunpack.c.l.b16 %v543
        %v1493 = vunpack.c.h.b16 %v543
        %v1494 = vunpack.c.l.b16 %v544
        %v1495 = vunpack.c.h.b16 %v544
        %v1496 = vunpack.c.l.b16 %v545
        %v1497 = vunpack.c.h.b16 %v545
        %v1498 = vunpack.c.l.b16 %v546
        %v1499 = vunpack.c.h.b16 %v546
        %v1500 = vunpack.c.l.b16 %v547
        %v1501 = vunpack.c.h.b16 %v547
        %v1502 = vunpack.c.l.b16 %v548
        %v1503 = vunpack.c.h.b16 %v548
        %v1504 = vunpack.c.l.b16 %v549
        %v1505 = vunpack.c.h.b16 %v549
        %v1506 = vunpack.c.l.b16 %v550
        %v1507 = vunpack.c.h.b16 %v550
        %v1508 = vunpack.c.l.b16 %v551
        %v1509 = vunpack.c.h.b16 %v551
        %v1510 = vunpack.c.l.b16 %v552
        %v1511 = vunpack.c.h.b16 %v552
        %v1512 = vunpack.c.l.b16 %v553
        %v1513 = vunpack.c.h.b16 %v553
        %v1514 = vunpack.c.l.b16 %v554
        %v1515 = vunpack.c.h.b16 %v554
        %v1516 = vunpack.c.l.b16 %v555
        %v1517 = vunpack.c.h.b16 %v555
        %v1518 = vunpack.c.l.b16 %v556
        %v1519 = vunpack.c.h.b16 %v556
        %v1520 = vunpack.c.l.b16 %v557
        %v1521 = vunpack.c.h.b16 %v557
        %v1522 = vunpack.c.l.b16 %v558
        %v1523 = vunpack.c.h.b16 %v558
        %v1524 = vunpack.c.l.b16 %v559
        %v1525 = vunpack.c.h.b16 %v559
        %v1526 = vunpack.c.l.b16 %v560
        %v1527 = vunpack.c.h.b16 %v560
        %v1528 = vunpack.c.l.b16 %v561
        %v1529 = vunpack.c.h.b16 %v561
        %v1530 = vunpack.c.l.b16 %v562
        %v1531 = vunpack.c.h.b16 %v562
        %v1532 = vunpack.c.l.b16 %v563
        %v1533 = vunpack.c.h.b16 %v563
        %v1534 = vunpack.c.l.b16 %v564
        %v1535 = vunpack.c.h.b16 %v564
        %v1536 = vunpack.c.l.b16 %v565
        %v1537 = vunpack.c.h.b16 %v565
        %v1538 = vunpack.c.l.b16 %v566
        %v1539 = vunpack.c.h.b16 %v566
        %v1540 = vunpack.c.l.b16 %v567
        %v1541 = vunpack.c.h.b16 %v567
        %v1542 = vunpack.c.l.b16 %v568
        %v1543 = vunpack.c.h.b16 %v568
        %v1544 = vunpack.c.l.b16 %v569
        %v1545 = vunpack.c.h.b16 %v569
        %v1546 = vunpack.c.l.b16 %v570
        %v1547 = vunpack.c.h.b16 %v570
        %v1548 = vunpack.c.l.b16 %v571
        %v1549 = vunpack.c.h.b16 %v571
        %v1550 = vunpack.c.l.b16 %v572
        %v1551 = vunpack.c.h.b16 %v572
        %v1552 = vunpack.c.l.b16 %v573
        %v1553 = vunpack.c.h.b16 %v573
        %v1554 = vunpack.c.l.b16 %v574
        %v1555 = vunpack.c.h.b16 %v574
        %v1556 = vunpack.c.l.b16 %v575
        %v1557 = vunpack.c.h.b16 %v575
        %v1558 = vunpack.c.l.b16 %v576
        %v1559 = vunpack.c.h.b16 %v576
        %v1560 = vunpack.c.l.b16 %v577
        %v1561 = vunpack.c.h.b16 %v577
        %v1562 = vunpack.c.l.b16 %v578
        %v1563 = vunpack.c.h.b16 %v578
        %v1564 = vunpack.c.l.b16 %v579
        %v1565 = vunpack.c.h.b16 %v579
        %v1566 = vunpack.c.l.b16 %v580
        %v1567 = vunpack.c.h.b16 %v580
        %v1568 = vunpack.c.l.b16 %v581
        %v1569 = vunpack.c.h.b16 %v581
        %v1570 = vunpack.c.l.b16 %v582
        %v1571 = vunpack.c.h.b16 %v582
        %v1572 = vunpack.c.l.b16 %v583
        %v1573 = vunpack.c.h.b16 %v583
        %v1574 = vunpack.c.l.b16 %v584
        %v1575 = vunpack.c.h.b16 %v584
        %v1576 = vunpack.c.l.b16 %v585
        %v1577 = vunpack.c.h.b16 %v585
        %v1578 = vunpack.c.l.b16 %v586
        %v1579 = vunpack.c.h.b16 %v586
        %v1580 = vunpack.c.l.b16 %v587
        %v1581 = vunpack.c.h.b16 %v587
        %v1582 = vunpack.c.l.b16 %v588
        %v1583 = vunpack.c.h.b16 %v588
        %v1584 = vunpack.c.l.b16 %v589
        %v1585 = vunpack.c.h.b16 %v589
        %v1586 = vunpack.c.l.b16 %v590
        %v1587 = vunpack.c.h.b16 %v590
        %v1588 = vunpack.c.l.b16 %v591
        %v1589 = vunpack.c.h.b16 %v591
        %v1590 = vunpack.c.l.b16 %v592
        %v1591 = vunpack.c.h.b16 %v592
        %v1592 = vunpack.c.l.b16 %v593
        %v1593 = vunpack.c.h.b16 %v593
        %v1594 = vunpack.c.l.b16 %v594
        %v1595 = vunpack.c.h.b16 %v594
        %v1596 = vunpack.c.l.b16 %v595
        %v1597 = vunpack.c.h.b16 %v595
        %v1598 = vunpack.c.l.b16 %v596
        %v1599 = vunpack.c.h.b16 %v596
        %v1600 = vunpack.c.l.b16 %v597
        %v1601 = vunpack.c.h.b16 %v597
        %v1602 = vunpack.c.l.b16 %v598
        %v1603 = vunpack.c.h.b16 %v598
        %v1604 = vunpack.c.l.b16 %v599
        %v1605 = vunpack.c.h.b16 %v599
        %v1606 = vunpack.c.l.b16 %v600
        %v1607 = vunpack.c.h.b16 %v600
        %v1608 = vunpack.c.l.b16 %v601
        %v1609 = vunpack.c.h.b16 %v601
        %v1610 = vunpack.c.l.b16 %v602
        %v1611 = vunpack.c.h.b16 %v602
        %v1612 = vunpack.c.l.b16 %v603
        %v1613 = vunpack.c.h.b16 %v603
        %v1614 = vunpack.c.l.b16 %v604
        %v1615 = vunpack.c.h.b16 %v604
        %v1616 = vunpack.c.l.b16 %v605
        %v1617 = vunpack.c.h.b16 %v605
        %v1618 = vunpack.c.l.b16 %v606
        %v1619 = vunpack.c.h.b16 %v606
        %v1620 = vunpack.c.l.b16 %v607
        %v1621 = vunpack.c.h.b16 %v607
        %v1622 = vunpack.c.l.b16 %v608
        %v1623 = vunpack.c.h.b16 %v608
        %v1624 = vunpack.c.l.b16 %v609
        %v1625 = vunpack.c.h.b16 %v609
        %v1626 = vunpack.c.l.b16 %v610
        %v1627 = vunpack.c.h.b16 %v610
        %v1628 = vunpack.c.l.b16 %v611
        %v1629 = vunpack.c.h.b16 %v611
        %v1630 = vunpack.c.l.b16 %v612
        %v1631 = vunpack.c.h.b16 %v612
        %v1632 = vunpack.c.l.b16 %v613
        %v1633 = vunpack.c.h.b16 %v613
        %v1634 = vunpack.c.l.b16 %v614
        %v1635 = vunpack.c.h.b16 %v614
        %v1636 = vunpack.c.l.b16 %v615
        %v1637 = vunpack.c.h.b16 %v615
        %v1638 = vunpack.c.l.b16 %v616
        %v1639 = vunpack.c.h.b16 %v616
        %v1640 = vunpack.c.l.b16 %v617
        %v1641 = vunpack.c.h.b16 %v617
        %v1642 = vunpack.c.l.b16 %v618
        %v1643 = vunpack.c.h.b16 %v618
        %v1644 = vunpack.c.l.b16 %v619
        %v1645 = vunpack.c.h.b16 %v619
        %v1646 = vunpack.c.l.b16 %v620
        %v1647 = vunpack.c.h.b16 %v620
        %v1648 = vunpack.c.l.b16 %v621
        %v1649 = vunpack.c.h.b16 %v621
        %v1650 = vunpack.c.l.b16 %v622
        %v1651 = vunpack.c.h.b16 %v622
        %v1652 = vunpack.c.l.b16 %v623
        %v1653 = vunpack.c.h.b16 %v623
        %v1654 = vunpack.c.l.b16 %v624
        %v1655 = vunpack.c.h.b16 %v624
        %v1656 = vunpack.c.l.b16 %v625
        %v1657 = vunpack.c.h.b16 %v625
        %v1658 = vunpack.c.l.b16 %v626
        %v1659 = vunpack.c.h.b16 %v626
        %v1660 = vunpack.c.l.b16 %v627
        %v1661 = vunpack.c.h.b16 %v627
        %v1662 = vunpack.c.l.b16 %v628
        %v1663 = vunpack.c.h.b16 %v628
        %v1664 = vunpack.c.l.b16 %v629
        %v1665 = vunpack.c.h.b16 %v629
        %v1666 = vunpack.c.l.b16 %v630
        %v1667 = vunpack.c.h.b16 %v630
        %v1668 = vunpack.c.l.b16 %v631
        %v1669 = vunpack.c.h.b16 %v631
        %v1670 = vunpack.c.l.b16 %v632
        %v1671 = vunpack.c.h.b16 %v632
        %v1672 = vunpack.c.l.b16 %v633
        %v1673 = vunpack.c.h.b16 %v633
        %v1674 = vunpack.c.l.b16 %v634
        %v1675 = vunpack.c.h.b16 %v634
        %v1676 = vunpack.c.l.b16 %v635
        %v1677 = vunpack.c.h.b16 %v635
        %v1678 = vunpack.c.l.b16 %v636
        %v1679 = vunpack.c.h.b16 %v636
        %v1680 = vunpack.c.l.b16 %v637
        %v1681 = vunpack.c.h.b16 %v637
        %v1682 = vunpack.c.l.b16 %v638
        %v1683 = vunpack.c.h.b16 %v638
        %v1684 = vunpack.c.l.b16 %v639
        %v1685 = vunpack.c.h.b16 %v639
        %v1686 = vunpack.c.l.b16 %v640
        %v1687 = vunpack.c.h.b16 %v640
        %v1688 = vunpack.c.l.b16 %v641
        %v1689 = vunpack.c.h.b16 %v641
        %v1690 = vunpack.c.l.b16 %v642
        %v1691 = vunpack.c.h.b16 %v642
        %v1692 = vunpack.c.l.b16 %v643
        %v1693 = vunpack.c.h.b16 %v643
        %v1694 = vunpack.c.l.b16 %v644
        %v1695 = vunpack.c.h.b16 %v644
        %v1696 = vunpack.c.l.b16 %v645
        %v1697 = vunpack.c.h.b16 %v645
        %v1698 = vunpack.c.l.b16 %v646
        %v1699 = vunpack.c.h.b16 %v646
        %v1700 = vunpack.c.l.b16 %v647
        %v1701 = vunpack.c.h.b16 %v647
        %v1702 = vunpack.c.l.b16 %v648
        %v1703 = vunpack.c.h.b16 %v648
        %v1704 = vunpack.c.l.b16 %v649
        %v1705 = vunpack.c.h.b16 %v649
        %v1706 = vunpack.c.l.b16 %v650
        %v1707 = vunpack.c.h.b16 %v650
        %v1708 = vunpack.c.l.b16 %v651
        %v1709 = vunpack.c.h.b16 %v651
        %v1710 = vunpack.c.l.b16 %v652
        %v1711 = vunpack.c.h.b16 %v652
        %v1712 = vunpack.c.l.b16 %v653
        %v1713 = vunpack.c.h.b16 %v653
        %v1714 = vunpack.c.l.b16 %v654
        %v1715 = vunpack.c.h.b16 %v654
        %v1716 = vunpack.c.l.b16 %v655
        %v1717 = vunpack.c.h.b16 %v655
        %v1718 = vunpack.c.l.b16 %v656
        %v1719 = vunpack.c.h.b16 %v656
        %v1720 = vunpack.c.l.b16 %v657
        %v1721 = vunpack.c.h.b16 %v657
        %v1722 = vunpack.c.l.b16 %v658
        %v1723 = vunpack.c.h.b16 %v658
        %v1724 = vunpack.c.l.b16 %v659
        %v1725 = vunpack.c.h.b16 %v659
        %v1726 = vunpack.c.l.b16 %v660
        %v1727 = vunpack.c.h.b16 %v660
        %v1728 = vunpack.c.l.b16 %v661
        %v1729 = vunpack.c.h.b16 %v661
        %v1730 = vunpack.c.l.b16 %v662
        %v1731 = vunpack.c.h.b16 %v662
        %v1732 = vunpack.c.l.b16 %v663
        %v1733 = vunpack.c.h.b16 %v663
        %v1734 = vunpack.c.l.b16 %v664
        %v1735 = vunpack.c.h.b16 %v664
        %v1736 = vunpack.c.l.b16 %v665
        %v1737 = vunpack.c.h.b16 %v665
        %v1738 = vunpack.c.l.b16 %v666
        %v1739 = vunpack.c.h.b16 %v666
        %v1740 = vunpack.c.l.b16 %v667
        %v1741 = vunpack.c.h.b16 %v667
        %v1742 = vunpack.c.l.b16 %v668
        %v1743 = vunpack.c.h.b16 %v668
        %v1744 = vunpack.c.l.b16 %v669
        %v1745 = vunpack.c.h.b16 %v669
        %v1746 = vunpack.c.l.b16 %v670
        %v1747 = vunpack.c.h.b16 %v670
        %v1748 = vunpack.c.l.b16 %v671
        %v1749 = vunpack.c.h.b16 %v671
        %v1750 = vunpack.c.l.b16 %v672
        %v1751 = vunpack.c.h.b16 %v672
        %v1752 = vunpack.c.l.b16 %v673
        %v1753 = vunpack.c.h.b16 %v673
        %v1754 = vunpack.c.l.b16 %v674
        %v1755 = vunpack.c.h.b16 %v674
        %v1756 = vunpack.c.l.b16 %v675
        %v1757 = vunpack.c.h.b16 %v675
        %v1758 = vunpack.c.l.b16 %v676
        %v1759 = vunpack.c.h.b16 %v676
        %v1760 = vunpack.c.l.b16 %v677
        %v1761 = vunpack.c.h.b16 %v677
        %v1762 = vunpack.c.l.b16 %v678
        %v1763 = vunpack.c.h.b16 %v678
        %v1764 = vunpack.c.l.b16 %v679
        %v1765 = vunpack.c.h.b16 %v679
        %v1766 = vunpack.c.l.b16 %v680
        %v1767 = vunpack.c.h.b16 %v680
        %v1768 = vunpack.c.l.b16 %v681
        %v1769 = vunpack.c.h.b16 %v681
        %v1770 = vunpack.c.l.b16 %v682
        %v1771 = vunpack.c.h.b16 %v682
        %v1772 = vunpack.c.l.b16 %v683
        %v1773 = vunpack.c.h.b16 %v683
        %v1774 = vunpack.c.l.b16 %v684
        %v1775 = vunpack.c.h.b16 %v684
        %v1776 = vunpack.c.l.b16 %v685
        %v1777 = vunpack.c.h.b16 %v685
        %v1778 = vunpack.c.l.b16 %v686
        %v1779 = vunpack.c.h.b16 %v686
        %v1780 = vunpack.c.l.b16 %v687
        %v1781 = vunpack.c.h.b16 %v687
        %v1782 = vunpack.c.l.b16 %v688
        %v1783 = vunpack.c.h.b16 %v688
        %v1784 = vpack.c.b16 %v1064, %v1062
        %v1785 = vpack.c.b16 %v1065, %v1063
        %v1786 = vpack.c.b16 %v1068, %v1066
        %v1787 = vpack.c.b16 %v1069, %v1067
        %v1788 = vpack.c.b16 %v1072, %v1070
        %v1789 = vpack.c.b16 %v1073, %v1071
        %v1790 = vpack.c.b16 %v1076, %v1074
        %v1791 = vpack.c.b16 %v1077, %v1075
        %v1792 = vpack.c.b16 %v1080, %v1078
        %v1793 = vpack.c.b16 %v1081, %v1079
        %v1794 = vpack.c.b16 %v1084, %v1082
        %v1795 = vpack.c.b16 %v1085, %v1083
        %v1796 = vpack.c.b16 %v1088, %v1086
        %v1797 = vpack.c.b16 %v1089, %v1087
        %v1798 = vpack.c.b16 %v1092, %v1090
        %v1799 = vpack.c.b16 %v1093, %v1091
        %v1800 = vpack.c.b16 %v1096, %v1094
        %v1801 = vpack.c.b16 %v1097, %v1095
        %v1802 = vpack.c.b16 %v1100, %v1098
        %v1803 = vpack.c.b16 %v1101, %v1099
        %v1804 = vpack.c.b16 %v1104, %v1102
        %v1805 = vpack.c.b16 %v1105, %v1103
        %v1806 = vpack.c.b16 %v1108, %v1106
        %v1807 = vpack.c.b16 %v1109, %v1107
        %v1808 = vpack.c.b16 %v1112, %v1110
        %v1809 = vpack.c.b16 %v1113, %v1111
        %v1810 = vpack.c.b16 %v1116, %v1114
        %v1811 = vpack.c.b16 %v1117, %v1115
        %v1812 = vpack.c.b16 %v1120, %v1118
        %v1813 = vpack.c.b16 %v1121, %v1119
        %v1814 = vpack.c.b16 %v1124, %v1122
        %v1815 = vpack.c.b16 %v1125, %v1123
        %v1816 = vpack.c.b16 %v1128, %v1126
        %v1817 = vpack.c.b16 %v1129, %v1127
        %v1818 = vpack.c.b16 %v1132, %v1130
        %v1819 = vpack.c.b16 %v1133, %v1131
        %v1820 = vpack.c.b16 %v1136, %v1134
        %v1821 = vpack.c.b16 %v1137, %v1135
        %v1822 = vpack.c.b16 %v1140, %v1138
        %v1823 = vpack.c.b16 %v1141, %v1139
        %v1824 = vpack.c.b16 %v1144, %v1142
        %v1825 = vpack.c.b16 %v1145, %v1143
        %v1826 = vpack.c.b16 %v1148, %v1146
        %v1827 = vpack.c.b16 %v1149, %v1147
        %v1828 = vpack.c.b16 %v1152, %v1150
        %v1829 = vpack.c.b16 %v1153, %v1151
        %v1830 = vpack.c.b16 %v1156, %v1154
        %v1831 = vpack.c.b16 %v1157, %v1155
        %v1832 = vpack.c.b16 %v1160, %v1158
        %v1833 = vpack.c.b16 %v1161, %v1159
        %v1834 = vpack.c.b16 %v1164, %v1162
        %v1835 = vpack.c.b16 %v1165, %v1163
        %v1836 = vpack.c.b16 %v1168, %v1166
        %v1837 = vpack.c.b16 %v1169, %v1167
        %v1838 = vpack.c.b16 %v1172, %v1170
        %v1839 = vpack.c.b16 %v1173, %v1171
        %v1840 = vpack.c.b16 %v1176, %v1174
        %v1841 = vpack.c.b16 %v1177, %v1175
        %v1842 = vpack.c.b16 %v1180, %v1178
        %v1843 = vpack.c.b16 %v1181, %v1179
        %v1844 = vpack.c.b16 %v1184, %v1182
        %v1845 = vpack.c.b16 %v1185, %v1183
        %v1846 = vpack.c.b16 %v1188, %v1186
        %v1847 = vpack.c.b16 %v1189, %v1187
        %v1848 = vpack.c.b16 %v1192, %v1190
        %v1849 = vpack.c.b16 %v1193, %v1191
        %v1850 = vpack.c.b16 %v1196, %v1194
        %v1851 = vpack.c.b16 %v1197, %v1195
        %v1852 = vpack.c.b16 %v1200, %v1198
        %v1853 = vpack.c.b16 %v1201, %v1199
        %v1854 = vpack.c.b16 %v1204, %v1202
        %v1855 = vpack.c.b16 %v1205, %v1203
        %v1856 = vpack.c.b16 %v1208, %v1206
        %v1857 = vpack.c.b16 %v1209, %v1207
        %v1858 = vpack.c.b16 %v1212, %v1210
        %v1859 = vpack.c.b16 %v1213, %v1211
        %v1860 = vpack.c.b16 %v1216, %v1214
        %v1861 = vpack.c.b16 %v1217, %v1215
        %v1862 = vpack.c.b16 %v1220, %v1218
        %v1863 = vpack.c.b16 %v1221, %v1219
        %v1864 = vpack.c.b16 %v1224, %v1222
        %v1865 = vpack.c.b16 %v1225, %v1223
        %v1866 = vpack.c.b16 %v1228, %v1226
        %v1867 = vpack.c.b16 %v1229, %v1227
        %v1868 = vpack.c.b16 %v1232, %v1230
        %v1869 = vpack.c.b16 %v1233, %v1231
        %v1870 = vpack.c.b16 %v1236, %v1234
        %v1871 = vpack.c.b16 %v1237, %v1235
        %v1872 = vpack.c.b16 %v1240, %v1238
        %v1873 = vpack.c.b16 %v1241, %v1239
        %v1874 = vpack.c.b16 %v1244, %v1242
        %v1875 = vpack.c.b16 %v1245, %v1243
        %v1876 = vpack.c.b16 %v1248, %v1246
        %v1877 = vpack.c.b16 %v1249, %v1247
        %v1878 = vpack.c.b16 %v1252, %v1250
        %v1879 = vpack.c.b16 %v1253, %v1251
        %v1880 = vpack.c.b16 %v1256, %v1254
        %v1881 = vpack.c.b16 %v1257, %v1255
        %v1882 = vpack.c.b16 %v1260, %v1258
        %v1883 = vpack.c.b16 %v1261, %v1259
        %v1884 = vpack.c.b16 %v1264, %v1262
        %v1885 = vpack.c.b16 %v1265, %v1263
        %v1886 = vpack.c.b16 %v1268, %v1266
        %v1887 = vpack.c.b16 %v1269, %v1267
        %v1888 = vpack.c.b16 %v1272, %v1270
        %v1889 = vpack.c.b16 %v1273, %v1271
        %v1890 = vpack.c.b16 %v1276, %v1274
        %v1891 = vpack.c.b16 %v1277, %v1275
        %v1892 = vpack.c.b16 %v1280, %v1278
        %v1893 = vpack.c.b16 %v1281, %v1279
        %v1894 = vpack.c.b16 %v1284, %v1282
        %v1895 = vpack.c.b16 %v1285, %v1283
        %v1896 = vpack.c.b16 %v1288, %v1286
        %v1897 = vpack.c.b16 %v1289, %v1287
        %v1898 = vpack.c.b16 %v1292, %v1290
        %v1899 = vpack.c.b16 %v1293, %v1291
        %v1900 = vpack.c.b16 %v1296, %v1294
        %v1901 = vpack.c.b16 %v1297, %v1295
        %v1902 = vpack.c.b16 %v1300, %v1298
        %v1903 = vpack.c.b16 %v1301, %v1299
        %v1904 = vpack.c.b16 %v1304, %v1302
        %v1905 = vpack.c.b16 %v1305, %v1303
        %v1906 = vpack.c.b16 %v1308, %v1306
        %v1907 = vpack.c.b16 %v1309, %v1307
        %v1908 = vpack.c.b16 %v1312, %v1310
        %v1909 = vpack.c.b16 %v1313, %v1311
        %v1910 = vpack.c.b16 %v1316, %v1314
        %v1911 = vpack.c.b16 %v1317, %v1315
        %v1912 = vpack.c.b16 %v1320, %v1318
        %v1913 = vpack.c.b16 %v1321, %v1319
        %v1914 = vpack.c.b16 %v1324, %v1322
        %v1915 = vpack.c.b16 %v1325, %v1323
        %v1916 = vpack.c.b16 %v1328, %v1326
        %v1917 = vpack.c.b16 %v1329, %v1327
        %v1918 = vpack.c.b16 %v1332, %v1330
        %v1919 = vpack.c.b16 %v1333, %v1331
        %v1920 = vpack.c.b16 %v1336, %v1334
        %v1921 = vpack.c.b16 %v1337, %v1335
        %v1922 = vpack.c.b16 %v1340, %v1338
        %v1923 = vpack.c.b16 %v1341, %v1339
        %v1924 = vpack.c.b16 %v1344, %v1342
        %v1925 = vpack.c.b16 %v1345, %v1343
        %v1926 = vpack.c.b16 %v1348, %v1346
        %v1927 = vpack.c.b16 %v1349, %v1347
        %v1928 = vpack.c.b16 %v1352, %v1350
        %v1929 = vpack.c.b16 %v1353, %v1351
        %v1930 = vpack.c.b16 %v1356, %v1354
        %v1931 = vpack.c.b16 %v1357, %v1355
        %v1932 = vpack.c.b16 %v1360, %v1358
        %v1933 = vpack.c.b16 %v1361, %v1359
        %v1934 = vpack.c.b16 %v1364, %v1362
        %v1935 = vpack.c.b16 %v1365, %v1363
        %v1936 = vpack.c.b16 %v1368, %v1366
        %v1937 = vpack.c.b16 %v1369, %v1367
        %v1938 = vpack.c.b16 %v1372, %v1370
        %v1939 = vpack.c.b16 %v1373, %v1371
        %v1940 = vpack.c.b16 %v1376, %v1374
        %v1941 = vpack.c.b16 %v1377, %v1375
        %v1942 = vpack.c.b16 %v1380, %v1378
        %v1943 = vpack.c.b16 %v1381, %v1379
        %v1944 = vpack.c.b16 %v1384, %v1382
        %v1945 = vpack.c.b16 %v1385, %v1383
        %v1946 = vpack.c.b16 %v1388, %v1386
        %v1947 = vpack.c.b16 %v1389, %v1387
        %v1948 = vpack.c.b16 %v1392, %v1390
        %v1949 = vpack.c.b16 %v1393, %v1391
        %v1950 = vpack.c.b16 %v1396, %v1394
        %v1951 = vpack.c.b16 %v1397, %v1395
        %v1952 = vpack.c.b16 %v1400, %v1398
        %v1953 = vpack.c.b16 %v1401, %v1399
        %v1954 = vpack.c.b16 %v1404, %v1402
        %v1955 = vpack.c.b16 %v1405, %v1403
        %v1956 = vpack.c.b16 %v1408, %v1406
        %v1957 = vpack.c.b16 %v1409, %v1407
        %v1958 = vpack.c.b16 %v1412, %v1410
        %v1959 = vpack.c.b16 %v1413, %v1411
        %v1960 = vpack.c.b16 %v1416, %v1414
        %v1961 = vpack.c.b16 %v1417, %v1415
        %v1962 = vpack.c.b16 %v1420, %v1418
        %v1963 = vpack.c.b16 %v1421, %v1419
        %v1964 = vpack.c.b16 %v1424, %v1422
        %v1965 = vpack.c.b16 %v1425, %v1423
        %v1966 = vpack.c.b16 %v1428, %v1426
        %v1967 = vpack.c.b16 %v1429, %v1427
        %v1968 = vpack.c.b16 %v1432, %v1430
        %v1969 = vpack.c.b16 %v1433, %v1431
        %v1970 = vpack.c.b16 %v1436, %v1434
        %v1971 = vpack.c.b16 %v1437, %v1435
        %v1972 = vpack.c.b16 %v1440, %v1438
        %v1973 = vpack.c.b16 %v1441, %v1439
        %v1974 = vpack.c.b16 %v1444, %v1442
        %v1975 = vpack.c.b16 %v1445, %v1443
        %v1976 = vpack.c.b16 %v1448, %v1446
        %v1977 = vpack.c.b16 %v1449, %v1447
        %v1978 = vpack.c.b16 %v1452, %v1450
        %v1979 = vpack.c.b16 %v1453, %v1451
        %v1980 = vpack.c.b16 %v1456, %v1454
        %v1981 = vpack.c.b16 %v1457, %v1455
        %v1982 = vpack.c.b16 %v1460, %v1458
        %v1983 = vpack.c.b16 %v1461, %v1459
        %v1984 = vpack.c.b16 %v1464, %v1462
        %v1985 = vpack.c.b16 %v1465, %v1463
        %v1986 = vpack.c.b16 %v1468, %v1466
        %v1987 = vpack.c.b16 %v1469, %v1467
        %v1988 = vpack.c.b16 %v1472, %v1470
        %v1989 = vpack.c.b16 %v1473, %v1471
        %v1990 = vpack.c.b16 %v1476, %v1474
        %v1991 = vpack.c.b16 %v1477, %v1475
        %v1992 = vpack.c.b16 %v1480, %v1478
        %v1993 = vpack.c.b16 %v1481, %v1479
        %v1994 = vpack.c.b16 %v1484, %v1482
        %v1995 = vpack.c.b16 %v1485, %v1483
        %v1996 = vpack.c.b16 %v1488, %v1486
        %v1997 = vpack.c.b16 %v1489, %v1487
        %v1998 = vpack.c.b16 %v1492, %v1490
        %v1999 = vpack.c.b16 %v1493, %v1491
        %v2000 = vpack.c.b16 %v1496, %v1494
        %v2001 = vpack.c.b16 %v1497, %v1495
        %v2002 = vpack.c.b16 %v1500, %v1498
        %v2003 = vpack.c.b16 %v1501, %v1499
        %v2004 = vpack.c.b16 %v1504, %v1502
        %v2005 = vpack.c.b16 %v1505, %v1503
        %v2006 = vpack.c.b16 %v1508, %v1506
        %v2007 = vpack.c.b16 %v1509, %v1507
        %v2008 = vpack.c.b16 %v1512, %v1510
        %v2009 = vpack.c.b16 %v1513, %v1511
        %v2010 = vpack.c.b16 %v1516, %v1514
        %v2011 = vpack.c.b16 %v1517, %v1515
        %v2012 = vpack.c.b16 %v1520, %v1518
        %v2013 = vpack.c.b16 %v1521, %v1519
        %v2014 = vpack.c.b16 %v1524, %v1522
        %v2015 = vpack.c.b16 %v1525, %v1523
        %v2016 = vpack.c.b16 %v1528, %v1526
        %v2017 = vpack.c.b16 %v1529, %v1527
        %v2018 = vpack.c.b16 %v1532, %v1530
        %v2019 = vpack.c.b16 %v1533, %v1531
        %v2020 = vpack.c.b16 %v1536, %v1534
        %v2021 = vpack.c.b16 %v1537, %v1535
        %v2022 = vpack.c.b16 %v1540, %v1538
        %v2023 = vpack.c.b16 %v1541, %v1539
        %v2024 = vpack.c.b16 %v1544, %v1542
        %v2025 = vpack.c.b16 %v1545, %v1543
        %v2026 = vpack.c.b16 %v1548, %v1546
        %v2027 = vpack.c.b16 %v1549, %v1547
        %v2028 = vpack.c.b16 %v1552, %v1550
        %v2029 = vpack.c.b16 %v1553, %v1551
        %v2030 = vpack.c.b16 %v1556, %v1554
        %v2031 = vpack.c.b16 %v1557, %v1555
        %v2032 = vpack.c.b16 %v1560, %v1558
        %v2033 = vpack.c.b16 %v1561, %v1559
        %v2034 = vpack.c.b16 %v1564, %v1562
        %v2035 = vpack.c.b16 %v1565, %v1563
        %v2036 = vpack.c.b16 %v1568, %v1566
        %v2037 = vpack.c.b16 %v1569, %v1567
        %v2038 = vpack.c.b16 %v1572, %v1570
        %v2039 = vpack.c.b16 %v1573, %v1571
        %v2040 = vpack.c.b16 %v1576, %v1574
        %v2041 = vpack.c.b16 %v1577, %v1575
        %v2042 = vpack.c.b16 %v1580, %v1578
        %v2043 = vpack.c.b16 %v1581, %v1579
        %v2044 = vpack.c.b16 %v1584, %v1582
        %v2045 = vpack.c.b16 %v1585, %v1583
        %v2046 = vpack.c.b16 %v1588, %v1586
        %v2047 = vpack.c.b16 %v1589, %v1587
        %v2048 = vpack.c.b16 %v1592, %v1590
        %v2049 = vpack.c.b16 %v1593, %v1591
        %v2050 = vpack.c.b16 %v1596, %v1594
        %v2051 = vpack.c.b16 %v1597, %v1595
        %v2052 = vpack.c.b16 %v1600, %v1598
        %v2053 = vpack.c.b16 %v1601, %v1599
        %v2054 = vpack.c.b16 %v1604, %v1602
        %v2055 = vpack.c.b16 %v1605, %v1603
        %v2056 = vpack.c.b16 %v1608, %v1606
        %v2057 = vpack.c.b16 %v1609, %v1607
        %v2058 = vpack.c.b16 %v1612, %v1610
        %v2059 = vpack.c.b16 %v1613, %v1611
        %v2060 = vpack.c.b16 %v1616, %v1614
        %v2061 = vpack.c.b16 %v1617, %v1615
        %v2062 = vpack.c.b16 %v1620, %v1618
        %v2063 = vpack.c.b16 %v1621, %v1619
        %v2064 = vpack.c.b16 %v1624, %v1622
        %v2065 = vpack.c.b16 %v1625, %v1623
        %v2066 = vpack.c.b16 %v1628, %v1626
        %v2067 = vpack.c.b16 %v1629, %v1627
        %v2068 = vpack.c.b16 %v1632, %v1630
        %v2069 = vpack.c.b16 %v1633, %v1631
        %v2070 = vpack.c.b16 %v1636, %v1634
        %v2071 = vpack.c.b16 %v1637, %v1635
        %v2072 = vpack.c.b16 %v1640, %v1638
        %v2073 = vpack.c.b16 %v1641, %v1639
        %v2074 = vpack.c.b16 %v1644, %v1642
        %v2075 = vpack.c.b16 %v1645, %v1643
        %v2076 = vpack.c.b16 %v1648, %v1646
        %v2077 = vpack.c.b16 %v1649, %v1647
        %v2078 = vpack.c.b16 %v1652, %v1650
        %v2079 = vpack.c.b16 %v1653, %v1651
        %v2080 = vpack.c.b16 %v1656, %v1654
        %v2081 = vpack.c.b16 %v1657, %v1655
        %v2082 = vpack.c.b16 %v1660, %v1658
        %v2083 = vpack.c.b16 %v1661, %v1659
        %v2084 = vpack.c.b16 %v1664, %v1662
        %v2085 = vpack.c.b16 %v1665, %v1663
        %v2086 = vpack.c.b16 %v1668, %v1666
        %v2087 = vpack.c.b16 %v1669, %v1667
        %v2088 = vpack.c.b16 %v1672, %v1670
        %v2089 = vpack.c.b16 %v1673, %v1671
        %v2090 = vpack.c.b16 %v1676, %v1674
        %v2091 = vpack.c.b16 %v1677, %v1675
        %v2092 = vpack.c.b16 %v1680, %v1678
        %v2093 = vpack.c.b16 %v1681, %v1679
        %v2094 = vpack.c.b16 %v1684, %v1682
        %v2095 = vpack.c.b16 %v1685, %v1683
        %v2096 = vpack.c.b16 %v1688, %v1686
        %v2097 = vpack.c.b16 %v1689, %v1687
        %v2098 = vpack.c.b16 %v1692, %v1690
        %v2099 = vpack.c.b16 %v1693, %v1691
        %v2100 = vpack.c.b16 %v1696, %v1694
        %v2101 = vpack.c.b16 %v1697, %v1695
        %v2102 = vpack.c.b16 %v1700, %v1698
        %v2103 = vpack.c.b16 %v1701, %v1699
        %v2104 = vpack.c.b16 %v1704, %v1702
        %v2105 = vpack.c.b16 %v1705, %v1703
        %v2106 = vpack.c.b16 %v1708, %v1706
        %v2107 = vpack.c.b16 %v1709, %v1707
        %v2108 = vpack.c.b16 %v1712, %v1710
        %v2109 = vpack.c.b16 %v1713, %v1711
        %v2110 = vpack.c.b16 %v1716, %v1714
        %v2111 = vpack.c.b16 %v1717, %v1715
        %v2112 = vpack.c.b16 %v1720, %v1718
        %v2113 = vpack.c.b16 %v1721, %v1719
        %v2114 = vpack.c.b16 %v1724, %v1722
        %v2115 = vpack.c.b16 %v1725, %v1723
        %v2116 = vpack.c.b16 %v1728, %v1726
        %v2117 = vpack.c.b16 %v1729, %v1727
        %v2118 = vpack.c.b16 %v1732, %v1730
        %v2119 = vpack.c.b16 %v1733, %v1731
        %v2120 = vpack.c.b16 %v1736, %v1734
        %v2121 = vpack.c.b16 %v1737, %v1735
        %v2122 = vpack.c.b16 %v1740, %v1738
        %v2123 = vpack.c.b16 %v1741, %v1739
        %v2124 = vpack.c.b16 %v1744, %v1742
        %v2125 = vpack.c.b16 %v1745, %v1743
        %v2126 = vpack.c.b16 %v1748, %v1746
        %v2127 = vpack.c.b16 %v1749, %v1747
        %v2128 = vpack.c.b16 %v1752, %v1750
        %v2129 = vpack.c.b16 %v1753, %v1751
        %v2130 = vpack.c.b16 %v1756, %v1754
        %v2131 = vpack.c.b16 %v1757, %v1755
        %v2132 = vpack.c.b16 %v1760, %v1758
        %v2133 = vpack.c.b16 %v1761, %v1759
        %v2134 = vpack.c.b16 %v1764, %v1762
        %v2135 = vpack.c.b16 %v1765, %v1763
        %v2136 = vpack.c.b16 %v1768, %v1766
        %v2137 = vpack.c.b16 %v1769, %v1767
        %v2138 = vpack.c.b16 %v1772, %v1770
        %v2139 = vpack.c.b16 %v1773, %v1771
        %v2140 = vpack.c.b16 %v1776, %v1774
        %v2141 = vpack.c.b16 %v1777, %v1775
        %v2142 = vpack.c.b16 %v1780, %v1778
        %v2143 = vpack.c.b16 %v1781, %v1779
        %v2144 = vpack.c.b16 %v1782, %v1782
        %v2145 = vpack.c.b16 %v1783, %v1783
        %vm2506 = vcmask 547840
        %v2508 = vsel %vm2506, %v327, 0
        %vm2510 = vcmask 1040384
        %vm2511 = vcmask 1041408
        %v2512 = vsel %vm2510, 4294967295, 65535
        %v2513 = vsel %vm2511, %v2512, 0
        %v2515 = vand.u32 %v2144, %v2513
        %v2518 = vand.u32 %v2145, %v2513
        %2520 = vmatprep.subr.bf16.mxu0 %v1799
        %2521 = vmatpush1.bf16.msra.mxu0 %v1798
        %2522 = vmatprep.subr.bf16.mxu0 %v1797
        %2523 = vmatpush1.bf16.msra.mxu0 %v1796
        %2524 = vmatprep.subr.bf16.mxu0 %v1795
        %2525 = vmatpush1.bf16.msra.mxu0 %v1794
        %2526 = vmatprep.subr.bf16.mxu0 %v1793
        %2527 = vmatpush1.bf16.msra.mxu0 %v1792
        %2528 = vmatprep.subr.bf16.mxu0 %v1791
        %2529 = vmatpush1.bf16.msra.mxu0 %v1790
        %2530 = vmatprep.subr.bf16.mxu0 %v1789
        %2531 = vmatpush1.bf16.msra.mxu0 %v1788
        %2532 = vmatprep.subr.bf16.mxu0 %v1787
        %2533 = vmatpush1.bf16.msra.mxu0 %v1786
        %2534 = vmatprep.subr.bf16.mxu0 %v1785
        %2535 = vmatpush1.bf16.msra.mxu0 %v1784
        %2536 = vmatprep.subr.bf16.mxu0 %v1815
        %2537 = vmatpush2.bf16.msra.mxu0 %v1814
        %2538 = vmatprep.subr.bf16.mxu0 %v1813
        %2539 = vmatpush2.bf16.msra.mxu0 %v1812
        %2540 = vmatprep.subr.bf16.mxu0 %v1811
        %2541 = vmatpush2.bf16.msra.mxu0 %v1810
        %2542 = vmatprep.subr.bf16.mxu0 %v1809
        %2543 = vmatpush2.bf16.msra.mxu0 %v1808
        %2544 = vmatprep.subr.bf16.mxu0 %v1807
        %2545 = vmatpush2.bf16.msra.mxu0 %v1806
        %2546 = vmatprep.subr.bf16.mxu0 %v1805
        %2547 = vmatpush2.bf16.msra.mxu0 %v1804
        %2548 = vmatprep.subr.bf16.mxu0 %v1803
        %2549 = vmatpush2.bf16.msra.mxu0 %v1802
        %2550 = vmatprep.subr.bf16.mxu0 %v1801
        %2551 = vmatpush2.bf16.msra.mxu0 %v1800
        %2552 = vmatprep.mubr.bf16.mxu0 %v306
        %2553 = vmatmul.mubr.bf16.gmra.mxu0 %v305
        %v2554 = vpop.f32.mrf.mxu0
        %v2555 = vadd.f32 %v694, %v2554
        %v2556 = vpop.f32.mrf.mxu0
        %v2557 = vadd.f32 %v698, %v2556
        %v2558 = vpop.f32.mrf.mxu0
        %v2559 = vpop.f32.mrf.mxu0
        %2560 = vdwg.mxu0
        %2561 = vmatprep.subr.bf16.mxu0 %v1831
        %2562 = vmatpush1.bf16.msra.mxu0 %v1830
        %2563 = vmatprep.subr.bf16.mxu0 %v1829
        %2564 = vmatpush1.bf16.msra.mxu0 %v1828
        %2565 = vmatprep.subr.bf16.mxu0 %v1827
        %2566 = vmatpush1.bf16.msra.mxu0 %v1826
        %2567 = vmatprep.subr.bf16.mxu0 %v1825
        %2568 = vmatpush1.bf16.msra.mxu0 %v1824
        %2569 = vmatprep.subr.bf16.mxu0 %v1823
        %2570 = vmatpush1.bf16.msra.mxu0 %v1822
        %2571 = vmatprep.subr.bf16.mxu0 %v1821
        %2572 = vmatpush1.bf16.msra.mxu0 %v1820
        %2573 = vmatprep.subr.bf16.mxu0 %v1819
        %2574 = vmatpush1.bf16.msra.mxu0 %v1818
        %2575 = vmatprep.subr.bf16.mxu0 %v1817
        %2576 = vmatpush1.bf16.msra.mxu0 %v1816
        %2577 = vmatprep.subr.bf16.mxu0 %v1847
        %2578 = vmatpush2.bf16.msra.mxu0 %v1846
        %2579 = vmatprep.subr.bf16.mxu0 %v1845
        %2580 = vmatpush2.bf16.msra.mxu0 %v1844
        %2581 = vmatprep.subr.bf16.mxu0 %v1843
        %2582 = vmatpush2.bf16.msra.mxu0 %v1842
        %2583 = vmatprep.subr.bf16.mxu0 %v1841
        %2584 = vmatpush2.bf16.msra.mxu0 %v1840
        %2585 = vmatprep.subr.bf16.mxu0 %v1839
        %2586 = vmatpush2.bf16.msra.mxu0 %v1838
        %2587 = vmatprep.subr.bf16.mxu0 %v1837
        %2588 = vmatpush2.bf16.msra.mxu0 %v1836
        %2589 = vmatprep.subr.bf16.mxu0 %v1835
        %2590 = vmatpush2.bf16.msra.mxu0 %v1834
        %2591 = vmatprep.subr.bf16.mxu0 %v1833
        %2592 = vmatpush2.bf16.msra.mxu0 %v1832
        %2593 = vmatprep.mubr.bf16.mxu0 %v308
        %2594 = vmatmul.mubr.bf16.gmra.mxu0 %v307
        %v2595 = vpop.f32.mrf.mxu0
        %v2596 = vadd.f32 %v2555, %v2595
        %v2597 = vpop.f32.mrf.mxu0
        %v2598 = vadd.f32 %v2557, %v2597
        %v2599 = vpop.f32.mrf.mxu0
        %v2600 = vpop.f32.mrf.mxu0
        %2601 = vdwg.mxu0
        %2602 = vmatprep.subr.bf16.mxu0 %v1863
        %2603 = vmatpush1.bf16.msra.mxu0 %v1862
        %2604 = vmatprep.subr.bf16.mxu0 %v1861
        %2605 = vmatpush1.bf16.msra.mxu0 %v1860
        %2606 = vmatprep.subr.bf16.mxu0 %v1859
        %2607 = vmatpush1.bf16.msra.mxu0 %v1858
        %2608 = vmatprep.subr.bf16.mxu0 %v1857
        %2609 = vmatpush1.bf16.msra.mxu0 %v1856
        %2610 = vmatprep.subr.bf16.mxu0 %v1855
        %2611 = vmatpush1.bf16.msra.mxu0 %v1854
        %2612 = vmatprep.subr.bf16.mxu0 %v1853
        %2613 = vmatpush1.bf16.msra.mxu0 %v1852
        %2614 = vmatprep.subr.bf16.mxu0 %v1851
        %2615 = vmatpush1.bf16.msra.mxu0 %v1850
        %2616 = vmatprep.subr.bf16.mxu0 %v1849
        %2617 = vmatpush1.bf16.msra.mxu0 %v1848
        %2618 = vmatprep.subr.bf16.mxu0 %v1879
        %2619 = vmatpush2.bf16.msra.mxu0 %v1878
        %2620 = vmatprep.subr.bf16.mxu0 %v1877
        %2621 = vmatpush2.bf16.msra.mxu0 %v1876
        %2622 = vmatprep.subr.bf16.mxu0 %v1875
        %2623 = vmatpush2.bf16.msra.mxu0 %v1874
        %2624 = vmatprep.subr.bf16.mxu0 %v1873
        %2625 = vmatpush2.bf16.msra.mxu0 %v1872
        %2626 = vmatprep.subr.bf16.mxu0 %v1871
        %2627 = vmatpush2.bf16.msra.mxu0 %v1870
        %2628 = vmatprep.subr.bf16.mxu0 %v1869
        %2629 = vmatpush2.bf16.msra.mxu0 %v1868
        %2630 = vmatprep.subr.bf16.mxu0 %v1867
        %2631 = vmatpush2.bf16.msra.mxu0 %v1866
        %2632 = vmatprep.subr.bf16.mxu0 %v1865
        %2633 = vmatpush2.bf16.msra.mxu0 %v1864
        %2634 = vmatprep.mubr.bf16.mxu0 %v310
        %2635 = vmatmul.mubr.bf16.gmra.mxu0 %v309
        %v2636 = vpop.f32.mrf.mxu0
        %v2637 = vadd.f32 %v2596, %v2636
        %v2638 = vpop.f32.mrf.mxu0
        %v2639 = vadd.f32 %v2598, %v2638
        %v2640 = vpop.f32.mrf.mxu0
        %v2641 = vpop.f32.mrf.mxu0
        %2642 = vdwg.mxu0
        %2643 = vmatprep.subr.bf16.mxu0 %v1895
        %2644 = vmatpush1.bf16.msra.mxu0 %v1894
        %2645 = vmatprep.subr.bf16.mxu0 %v1893
        %2646 = vmatpush1.bf16.msra.mxu0 %v1892
        %2647 = vmatprep.subr.bf16.mxu0 %v1891
        %2648 = vmatpush1.bf16.msra.mxu0 %v1890
        %2649 = vmatprep.subr.bf16.mxu0 %v1889
        %2650 = vmatpush1.bf16.msra.mxu0 %v1888
        %2651 = vmatprep.subr.bf16.mxu0 %v1887
        %2652 = vmatpush1.bf16.msra.mxu0 %v1886
        %2653 = vmatprep.subr.bf16.mxu0 %v1885
        %2654 = vmatpush1.bf16.msra.mxu0 %v1884
        %2655 = vmatprep.subr.bf16.mxu0 %v1883
        %2656 = vmatpush1.bf16.msra.mxu0 %v1882
        %2657 = vmatprep.subr.bf16.mxu0 %v1881
        %2658 = vmatpush1.bf16.msra.mxu0 %v1880
        %2659 = vmatprep.subr.bf16.mxu0 %v1911
        %2660 = vmatpush2.bf16.msra.mxu0 %v1910
        %2661 = vmatprep.subr.bf16.mxu0 %v1909
        %2662 = vmatpush2.bf16.msra.mxu0 %v1908
        %2663 = vmatprep.subr.bf16.mxu0 %v1907
        %2664 = vmatpush2.bf16.msra.mxu0 %v1906
        %2665 = vmatprep.subr.bf16.mxu0 %v1905
        %2666 = vmatpush2.bf16.msra.mxu0 %v1904
        %2667 = vmatprep.subr.bf16.mxu0 %v1903
        %2668 = vmatpush2.bf16.msra.mxu0 %v1902
        %2669 = vmatprep.subr.bf16.mxu0 %v1901
        %2670 = vmatpush2.bf16.msra.mxu0 %v1900
        %2671 = vmatprep.subr.bf16.mxu0 %v1899
        %2672 = vmatpush2.bf16.msra.mxu0 %v1898
        %2673 = vmatprep.subr.bf16.mxu0 %v1897
        %2674 = vmatpush2.bf16.msra.mxu0 %v1896
        %2675 = vmatprep.mubr.bf16.mxu0 %v312
        %2676 = vmatmul.mubr.bf16.gmra.mxu0 %v311
        %v2677 = vpop.f32.mrf.mxu0
        %v2678 = vadd.f32 %v2637, %v2677
        %v2679 = vpop.f32.mrf.mxu0
        %v2680 = vadd.f32 %v2639, %v2679
        %v2681 = vpop.f32.mrf.mxu0
        %v2682 = vpop.f32.mrf.mxu0
        %2683 = vdwg.mxu0
        %2684 = vmatprep.subr.bf16.mxu0 %v1927
        %2685 = vmatpush1.bf16.msra.mxu0 %v1926
        %2686 = vmatprep.subr.bf16.mxu0 %v1925
        %2687 = vmatpush1.bf16.msra.mxu0 %v1924
        %2688 = vmatprep.subr.bf16.mxu0 %v1923
        %2689 = vmatpush1.bf16.msra.mxu0 %v1922
        %2690 = vmatprep.subr.bf16.mxu0 %v1921
        %2691 = vmatpush1.bf16.msra.mxu0 %v1920
        %2692 = vmatprep.subr.bf16.mxu0 %v1919
        %2693 = vmatpush1.bf16.msra.mxu0 %v1918
        %2694 = vmatprep.subr.bf16.mxu0 %v1917
        %2695 = vmatpush1.bf16.msra.mxu0 %v1916
        %2696 = vmatprep.subr.bf16.mxu0 %v1915
        %2697 = vmatpush1.bf16.msra.mxu0 %v1914
        %2698 = vmatprep.subr.bf16.mxu0 %v1913
        %2699 = vmatpush1.bf16.msra.mxu0 %v1912
        %2700 = vmatprep.subr.bf16.mxu0 %v1943
        %2701 = vmatpush2.bf16.msra.mxu0 %v1942
        %2702 = vmatprep.subr.bf16.mxu0 %v1941
        %2703 = vmatpush2.bf16.msra.mxu0 %v1940
        %2704 = vmatprep.subr.bf16.mxu0 %v1939
        %2705 = vmatpush2.bf16.msra.mxu0 %v1938
        %2706 = vmatprep.subr.bf16.mxu0 %v1937
        %2707 = vmatpush2.bf16.msra.mxu0 %v1936
        %2708 = vmatprep.subr.bf16.mxu0 %v1935
        %2709 = vmatpush2.bf16.msra.mxu0 %v1934
        %2710 = vmatprep.subr.bf16.mxu0 %v1933
        %2711 = vmatpush2.bf16.msra.mxu0 %v1932
        %2712 = vmatprep.subr.bf16.mxu0 %v1931
        %2713 = vmatpush2.bf16.msra.mxu0 %v1930
        %2714 = vmatprep.subr.bf16.mxu0 %v1929
        %2715 = vmatpush2.bf16.msra.mxu0 %v1928
        %2716 = vmatprep.mubr.bf16.mxu0 %v314
        %2717 = vmatmul.mubr.bf16.gmra.mxu0 %v313
        %v2718 = vpop.f32.mrf.mxu0
        %v2719 = vadd.f32 %v2678, %v2718
        %v2720 = vpop.f32.mrf.mxu0
        %v2721 = vadd.f32 %v2680, %v2720
        %v2722 = vpop.f32.mrf.mxu0
        %v2723 = vpop.f32.mrf.mxu0
        %2724 = vdwg.mxu0
        %2725 = vmatprep.subr.bf16.mxu0 %v1959
        %2726 = vmatpush1.bf16.msra.mxu0 %v1958
        %2727 = vmatprep.subr.bf16.mxu0 %v1957
        %2728 = vmatpush1.bf16.msra.mxu0 %v1956
        %2729 = vmatprep.subr.bf16.mxu0 %v1955
        %2730 = vmatpush1.bf16.msra.mxu0 %v1954
        %2731 = vmatprep.subr.bf16.mxu0 %v1953
        %2732 = vmatpush1.bf16.msra.mxu0 %v1952
        %2733 = vmatprep.subr.bf16.mxu0 %v1951
        %2734 = vmatpush1.bf16.msra.mxu0 %v1950
        %2735 = vmatprep.subr.bf16.mxu0 %v1949
        %2736 = vmatpush1.bf16.msra.mxu0 %v1948
        %2737 = vmatprep.subr.bf16.mxu0 %v1947
        %2738 = vmatpush1.bf16.msra.mxu0 %v1946
        %2739 = vmatprep.subr.bf16.mxu0 %v1945
        %2740 = vmatpush1.bf16.msra.mxu0 %v1944
        %2741 = vmatprep.subr.bf16.mxu0 %v1975
        %2742 = vmatpush2.bf16.msra.mxu0 %v1974
        %2743 = vmatprep.subr.bf16.mxu0 %v1973
        %2744 = vmatpush2.bf16.msra.mxu0 %v1972
        %2745 = vmatprep.subr.bf16.mxu0 %v1971
        %2746 = vmatpush2.bf16.msra.mxu0 %v1970
        %2747 = vmatprep.subr.bf16.mxu0 %v1969
        %2748 = vmatpush2.bf16.msra.mxu0 %v1968
        %2749 = vmatprep.subr.bf16.mxu0 %v1967
        %2750 = vmatpush2.bf16.msra.mxu0 %v1966
        %2751 = vmatprep.subr.bf16.mxu0 %v1965
        %2752 = vmatpush2.bf16.msra.mxu0 %v1964
        %2753 = vmatprep.subr.bf16.mxu0 %v1963
        %2754 = vmatpush2.bf16.msra.mxu0 %v1962
        %2755 = vmatprep.subr.bf16.mxu0 %v1961
        %2756 = vmatpush2.bf16.msra.mxu0 %v1960
        %2757 = vmatprep.mubr.bf16.mxu0 %v316
        %2758 = vmatmul.mubr.bf16.gmra.mxu0 %v315
        %v2759 = vpop.f32.mrf.mxu0
        %v2760 = vadd.f32 %v2719, %v2759
        %v2761 = vpop.f32.mrf.mxu0
        %v2762 = vadd.f32 %v2721, %v2761
        %v2763 = vpop.f32.mrf.mxu0
        %v2764 = vpop.f32.mrf.mxu0
        %2765 = vdwg.mxu0
        %2766 = vmatprep.subr.bf16.mxu0 %v1991
        %2767 = vmatpush1.bf16.msra.mxu0 %v1990
        %2768 = vmatprep.subr.bf16.mxu0 %v1989
        %2769 = vmatpush1.bf16.msra.mxu0 %v1988
        %2770 = vmatprep.subr.bf16.mxu0 %v1987
        %2771 = vmatpush1.bf16.msra.mxu0 %v1986
        %2772 = vmatprep.subr.bf16.mxu0 %v1985
        %2773 = vmatpush1.bf16.msra.mxu0 %v1984
        %2774 = vmatprep.subr.bf16.mxu0 %v1983
        %2775 = vmatpush1.bf16.msra.mxu0 %v1982
        %2776 = vmatprep.subr.bf16.mxu0 %v1981
        %2777 = vmatpush1.bf16.msra.mxu0 %v1980
        %2778 = vmatprep.subr.bf16.mxu0 %v1979
        %2779 = vmatpush1.bf16.msra.mxu0 %v1978
        %2780 = vmatprep.subr.bf16.mxu0 %v1977
        %2781 = vmatpush1.bf16.msra.mxu0 %v1976
        %2782 = vmatprep.subr.bf16.mxu0 %v2007
        %2783 = vmatpush2.bf16.msra.mxu0 %v2006
        %2784 = vmatprep.subr.bf16.mxu0 %v2005
        %2785 = vmatpush2.bf16.msra.mxu0 %v2004
        %2786 = vmatprep.subr.bf16.mxu0 %v2003
        %2787 = vmatpush2.bf16.msra.mxu0 %v2002
        %2788 = vmatprep.subr.bf16.mxu0 %v2001
        %2789 = vmatpush2.bf16.msra.mxu0 %v2000
        %2790 = vmatprep.subr.bf16.mxu0 %v1999
        %2791 = vmatpush2.bf16.msra.mxu0 %v1998
        %2792 = vmatprep.subr.bf16.mxu0 %v1997
        %2793 = vmatpush2.bf16.msra.mxu0 %v1996
        %2794 = vmatprep.subr.bf16.mxu0 %v1995
        %2795 = vmatpush2.bf16.msra.mxu0 %v1994
        %2796 = vmatprep.subr.bf16.mxu0 %v1993
        %2797 = vmatpush2.bf16.msra.mxu0 %v1992
        %2798 = vmatprep.mubr.bf16.mxu0 %v318
        %2799 = vmatmul.mubr.bf16.gmra.mxu0 %v317
        %v2800 = vpop.f32.mrf.mxu0
        %v2801 = vadd.f32 %v2760, %v2800
        %v2802 = vpop.f32.mrf.mxu0
        %v2803 = vadd.f32 %v2762, %v2802
        %v2804 = vpop.f32.mrf.mxu0
        %v2805 = vpop.f32.mrf.mxu0
        %2806 = vdwg.mxu0
        %2807 = vmatprep.subr.bf16.mxu0 %v2023
        %2808 = vmatpush1.bf16.msra.mxu0 %v2022
        %2809 = vmatprep.subr.bf16.mxu0 %v2021
        %2810 = vmatpush1.bf16.msra.mxu0 %v2020
        %2811 = vmatprep.subr.bf16.mxu0 %v2019
        %2812 = vmatpush1.bf16.msra.mxu0 %v2018
        %2813 = vmatprep.subr.bf16.mxu0 %v2017
        %2814 = vmatpush1.bf16.msra.mxu0 %v2016
        %2815 = vmatprep.subr.bf16.mxu0 %v2015
        %2816 = vmatpush1.bf16.msra.mxu0 %v2014
        %2817 = vmatprep.subr.bf16.mxu0 %v2013
        %2818 = vmatpush1.bf16.msra.mxu0 %v2012
        %2819 = vmatprep.subr.bf16.mxu0 %v2011
        %2820 = vmatpush1.bf16.msra.mxu0 %v2010
        %2821 = vmatprep.subr.bf16.mxu0 %v2009
        %2822 = vmatpush1.bf16.msra.mxu0 %v2008
        %2823 = vmatprep.subr.bf16.mxu0 %v2039
        %2824 = vmatpush2.bf16.msra.mxu0 %v2038
        %2825 = vmatprep.subr.bf16.mxu0 %v2037
        %2826 = vmatpush2.bf16.msra.mxu0 %v2036
        %2827 = vmatprep.subr.bf16.mxu0 %v2035
        %2828 = vmatpush2.bf16.msra.mxu0 %v2034
        %2829 = vmatprep.subr.bf16.mxu0 %v2033
        %2830 = vmatpush2.bf16.msra.mxu0 %v2032
        %2831 = vmatprep.subr.bf16.mxu0 %v2031
        %2832 = vmatpush2.bf16.msra.mxu0 %v2030
        %2833 = vmatprep.subr.bf16.mxu0 %v2029
        %2834 = vmatpush2.bf16.msra.mxu0 %v2028
        %2835 = vmatprep.subr.bf16.mxu0 %v2027
        %2836 = vmatpush2.bf16.msra.mxu0 %v2026
        %2837 = vmatprep.subr.bf16.mxu0 %v2025
        %2838 = vmatpush2.bf16.msra.mxu0 %v2024
        %2839 = vmatprep.mubr.bf16.mxu0 %v320
        %2840 = vmatmul.mubr.bf16.gmra.mxu0 %v319
        %v2841 = vpop.f32.mrf.mxu0
        %v2842 = vadd.f32 %v2801, %v2841
        %v2843 = vpop.f32.mrf.mxu0
        %v2844 = vadd.f32 %v2803, %v2843
        %v2845 = vpop.f32.mrf.mxu0
        %v2846 = vpop.f32.mrf.mxu0
        %2847 = vdwg.mxu0
        %2848 = vmatprep.subr.bf16.mxu0 %v2055
        %2849 = vmatpush1.bf16.msra.mxu0 %v2054
        %2850 = vmatprep.subr.bf16.mxu0 %v2053
        %2851 = vmatpush1.bf16.msra.mxu0 %v2052
        %2852 = vmatprep.subr.bf16.mxu0 %v2051
        %2853 = vmatpush1.bf16.msra.mxu0 %v2050
        %2854 = vmatprep.subr.bf16.mxu0 %v2049
        %2855 = vmatpush1.bf16.msra.mxu0 %v2048
        %2856 = vmatprep.subr.bf16.mxu0 %v2047
        %2857 = vmatpush1.bf16.msra.mxu0 %v2046
        %2858 = vmatprep.subr.bf16.mxu0 %v2045
        %2859 = vmatpush1.bf16.msra.mxu0 %v2044
        %2860 = vmatprep.subr.bf16.mxu0 %v2043
        %2861 = vmatpush1.bf16.msra.mxu0 %v2042
        %2862 = vmatprep.subr.bf16.mxu0 %v2041
        %2863 = vmatpush1.bf16.msra.mxu0 %v2040
        %2864 = vmatprep.subr.bf16.mxu0 %v2071
        %2865 = vmatpush2.bf16.msra.mxu0 %v2070
        %2866 = vmatprep.subr.bf16.mxu0 %v2069
        %2867 = vmatpush2.bf16.msra.mxu0 %v2068
        %2868 = vmatprep.subr.bf16.mxu0 %v2067
        %2869 = vmatpush2.bf16.msra.mxu0 %v2066
        %2870 = vmatprep.subr.bf16.mxu0 %v2065
        %2871 = vmatpush2.bf16.msra.mxu0 %v2064
        %2872 = vmatprep.subr.bf16.mxu0 %v2063
        %2873 = vmatpush2.bf16.msra.mxu0 %v2062
        %2874 = vmatprep.subr.bf16.mxu0 %v2061
        %2875 = vmatpush2.bf16.msra.mxu0 %v2060
        %2876 = vmatprep.subr.bf16.mxu0 %v2059
        %2877 = vmatpush2.bf16.msra.mxu0 %v2058
        %2878 = vmatprep.subr.bf16.mxu0 %v2057
        %2879 = vmatpush2.bf16.msra.mxu0 %v2056
        %2880 = vmatprep.mubr.bf16.mxu0 %v322
        %2881 = vmatmul.mubr.bf16.gmra.mxu0 %v321
        %v2882 = vpop.f32.mrf.mxu0
        %v2883 = vadd.f32 %v2842, %v2882
        %v2884 = vpop.f32.mrf.mxu0
        %v2885 = vadd.f32 %v2844, %v2884
        %v2886 = vpop.f32.mrf.mxu0
        %v2887 = vpop.f32.mrf.mxu0
        %2888 = vdwg.mxu0
        %2889 = vmatprep.subr.bf16.mxu0 %v2087
        %2890 = vmatpush1.bf16.msra.mxu0 %v2086
        %2891 = vmatprep.subr.bf16.mxu0 %v2085
        %2892 = vmatpush1.bf16.msra.mxu0 %v2084
        %2893 = vmatprep.subr.bf16.mxu0 %v2083
        %2894 = vmatpush1.bf16.msra.mxu0 %v2082
        %2895 = vmatprep.subr.bf16.mxu0 %v2081
        %2896 = vmatpush1.bf16.msra.mxu0 %v2080
        %2897 = vmatprep.subr.bf16.mxu0 %v2079
        %2898 = vmatpush1.bf16.msra.mxu0 %v2078
        %2899 = vmatprep.subr.bf16.mxu0 %v2077
        %2900 = vmatpush1.bf16.msra.mxu0 %v2076
        %2901 = vmatprep.subr.bf16.mxu0 %v2075
        %2902 = vmatpush1.bf16.msra.mxu0 %v2074
        %2903 = vmatprep.subr.bf16.mxu0 %v2073
        %2904 = vmatpush1.bf16.msra.mxu0 %v2072
        %2905 = vmatprep.subr.bf16.mxu0 %v2103
        %2906 = vmatpush2.bf16.msra.mxu0 %v2102
        %2907 = vmatprep.subr.bf16.mxu0 %v2101
        %2908 = vmatpush2.bf16.msra.mxu0 %v2100
        %2909 = vmatprep.subr.bf16.mxu0 %v2099
        %2910 = vmatpush2.bf16.msra.mxu0 %v2098
        %2911 = vmatprep.subr.bf16.mxu0 %v2097
        %2912 = vmatpush2.bf16.msra.mxu0 %v2096
        %2913 = vmatprep.subr.bf16.mxu0 %v2095
        %2914 = vmatpush2.bf16.msra.mxu0 %v2094
        %2915 = vmatprep.subr.bf16.mxu0 %v2093
        %2916 = vmatpush2.bf16.msra.mxu0 %v2092
        %2917 = vmatprep.subr.bf16.mxu0 %v2091
        %2918 = vmatpush2.bf16.msra.mxu0 %v2090
        %2919 = vmatprep.subr.bf16.mxu0 %v2089
        %2920 = vmatpush2.bf16.msra.mxu0 %v2088
        %2921 = vmatprep.mubr.bf16.mxu0 %v324
        %2922 = vmatmul.mubr.bf16.gmra.mxu0 %v323
        %v2923 = vpop.f32.mrf.mxu0
        %v2924 = vadd.f32 %v2883, %v2923
        %v2925 = vpop.f32.mrf.mxu0
        %v2926 = vadd.f32 %v2885, %v2925
        %v2927 = vpop.f32.mrf.mxu0
        %v2928 = vpop.f32.mrf.mxu0
        %2929 = vdwg.mxu0
        %2930 = vmatprep.subr.bf16.mxu0 %v2119
        %2931 = vmatpush1.bf16.msra.mxu0 %v2118
        %2932 = vmatprep.subr.bf16.mxu0 %v2117
        %2933 = vmatpush1.bf16.msra.mxu0 %v2116
        %2934 = vmatprep.subr.bf16.mxu0 %v2115
        %2935 = vmatpush1.bf16.msra.mxu0 %v2114
        %2936 = vmatprep.subr.bf16.mxu0 %v2113
        %2937 = vmatpush1.bf16.msra.mxu0 %v2112
        %2938 = vmatprep.subr.bf16.mxu0 %v2111
        %2939 = vmatpush1.bf16.msra.mxu0 %v2110
        %2940 = vmatprep.subr.bf16.mxu0 %v2109
        %2941 = vmatpush1.bf16.msra.mxu0 %v2108
        %2942 = vmatprep.subr.bf16.mxu0 %v2107
        %2943 = vmatpush1.bf16.msra.mxu0 %v2106
        %2944 = vmatprep.subr.bf16.mxu0 %v2105
        %2945 = vmatpush1.bf16.msra.mxu0 %v2104
        %2946 = vmatprep.subr.bf16.mxu0 %v2135
        %2947 = vmatpush2.bf16.msra.mxu0 %v2134
        %2948 = vmatprep.subr.bf16.mxu0 %v2133
        %2949 = vmatpush2.bf16.msra.mxu0 %v2132
        %2950 = vmatprep.subr.bf16.mxu0 %v2131
        %2951 = vmatpush2.bf16.msra.mxu0 %v2130
        %2952 = vmatprep.subr.bf16.mxu0 %v2129
        %2953 = vmatpush2.bf16.msra.mxu0 %v2128
        %2954 = vmatprep.subr.bf16.mxu0 %v2127
        %2955 = vmatpush2.bf16.msra.mxu0 %v2126
        %2956 = vmatprep.subr.bf16.mxu0 %v2125
        %2957 = vmatpush2.bf16.msra.mxu0 %v2124
        %2958 = vmatprep.subr.bf16.mxu0 %v2123
        %2959 = vmatpush2.bf16.msra.mxu0 %v2122
        %2960 = vmatprep.subr.bf16.mxu0 %v2121
        %2961 = vmatpush2.bf16.msra.mxu0 %v2120
        %2962 = vmatprep.mubr.bf16.mxu0 %v326
        %2963 = vmatmul.mubr.bf16.gmra.mxu0 %v325
        %v2964 = vpop.f32.mrf.mxu0
        %v2965 = vadd.f32 %v2924, %v2964
        %v2966 = vpop.f32.mrf.mxu0
        %v2967 = vadd.f32 %v2926, %v2966
        %v2968 = vpop.f32.mrf.mxu0
        %v2969 = vpop.f32.mrf.mxu0
        %2970 = vdwg.mxu0
        %2971 = vmatprep.subr.bf16.mxu0 0
        %2972 = vmatpush1.bf16.msra.mxu0 0
        %2973 = vmatprep.subr.bf16.mxu0 0
        %2974 = vmatpush1.bf16.msra.mxu0 0
        %2975 = vmatprep.subr.bf16.mxu0 0
        %2976 = vmatpush1.bf16.msra.mxu0 0
        %2977 = vmatprep.subr.bf16.mxu0 %v2518
        %2978 = vmatpush1.bf16.msra.mxu0 %v2515
        %2979 = vmatprep.subr.bf16.mxu0 %v2143
        %2980 = vmatpush1.bf16.msra.mxu0 %v2142
        %2981 = vmatprep.subr.bf16.mxu0 %v2141
        %2982 = vmatpush1.bf16.msra.mxu0 %v2140
        %2983 = vmatprep.subr.bf16.mxu0 %v2139
        %2984 = vmatpush1.bf16.msra.mxu0 %v2138
        %2985 = vmatprep.subr.bf16.mxu0 %v2137
        %2986 = vmatpush1.bf16.msra.mxu0 %v2136
        %2987 = vmatprep.subr.bf16.mxu0 0
        %2988 = vmatpush2.bf16.msra.mxu0 0
        %2989 = vmatprep.subr.bf16.mxu0 0
        %2990 = vmatpush2.bf16.msra.mxu0 0
        %2991 = vmatprep.subr.bf16.mxu0 0
        %2992 = vmatpush2.bf16.msra.mxu0 0
        %2993 = vmatprep.subr.bf16.mxu0 0
        %2994 = vmatpush2.bf16.msra.mxu0 0
        %2995 = vmatprep.subr.bf16.mxu0 0
        %2996 = vmatpush2.bf16.msra.mxu0 0
        %2997 = vmatprep.subr.bf16.mxu0 0
        %2998 = vmatpush2.bf16.msra.mxu0 0
        %2999 = vmatprep.subr.bf16.mxu0 0
        %3000 = vmatpush2.bf16.msra.mxu0 0
        %3001 = vmatprep.subr.bf16.mxu0 0
        %3002 = vmatpush2.bf16.msra.mxu0 0
        %3003 = vmatprep.mubr.bf16.mxu0 0
        %3004 = vmatmul.mubr.bf16.gmra.mxu0 %v2508
        %v3005 = vpop.f32.mrf.mxu0
        %v3006 = vadd.f32 %v2965, %v3005
        %v3007 = vpop.f32.mrf.mxu0
        %v3008 = vadd.f32 %v2967, %v3007
        %v3009 = vpop.f32.mrf.mxu0
        %v3010 = vpop.f32.mrf.mxu0
        %3011 = vdwg.mxu0
        %v3012 = vxor.u32 %v3006, 2147483648
        %v3013 = vxor.u32 %v3008, 2147483648
        %v3014 = vmul.f32 %v3012, 1.442695
        %v3015 = vpow.pop %v3014
        %v3016 = vmul.f32 %v3013, 1.442695
        %v3017 = vpow.pop %v3016
        %v3018 = vadd.f32 %v3015, 1.0
        %v3019 = vadd.f32 %v3017, 1.0
        %v3020 = vrcp.pop %v3018
        %v3021 = vmul.f32 1.0, %v3020
        %v3022 = vrcp.pop %v3019
        %v3023 = vmul.f32 1.0, %v3022
        %v3024 = vpack.c.bf16 %v3021, %v3021
        %v3025 = vpack.c.bf16 %v3023, %v3023
        %v3026 = vld [vmem:[%s3] sm:$0xf]
        %v3027 = vld [vmem:[%s3 + $0x4] sm:$0xf]
        %v3028 = vld [vmem:[%s3 + $0x8] sm:$0xf]
        %v3029 = vld [vmem:[%s3 + $0xc] sm:$0xf]
        %v3030 = vld [vmem:[%s3 + $0x10] sm:$0xf]
        %v3031 = vld [vmem:[%s3 + $0x14] sm:$0xf]
        %v3032 = vld [vmem:[%s3 + $0x18] sm:$0xf]
        %v3033 = vld [vmem:[%s3 + $0x1c] sm:$0xf]
        %v3034 = vld [vmem:[%s3 + $0x20] sm:$0xf]
        %v3035 = vld [vmem:[%s3 + $0x24] sm:$0xf]
        %v3036 = vld [vmem:[%s3 + $0x28] sm:$0xf]
        %v3037 = vld [vmem:[%s3 + $0x2c] sm:$0xf]
        %v3038 = vld [vmem:[%s3 + $0x30] sm:$0xf]
        %v3039 = vld [vmem:[%s3 + $0x34] sm:$0xf]
        %v3040 = vld [vmem:[%s3 + $0x38] sm:$0xf]
        %v3041 = vld [vmem:[%s3 + $0x3c] sm:$0xf]
        %v3042 = vld [vmem:[%s3 + $0x40] sm:$0xf]
        %v3043 = vld [vmem:[%s3 + $0x44] sm:$0xf]
        %v3044 = vld [vmem:[%s3 + $0x48] sm:$0xf]
        %v3045 = vld [vmem:[%s3 + $0x4c] sm:$0xf]
        %v3046 = vld [vmem:[%s3 + $0x50] sm:$0xf]
        %v3047 = vld [vmem:[%s3 + $0x54] sm:$0xf]
        %v3048 = vld [vmem:[%s3 + $0x58] sm:$0xf]
        %v3049 = vld [vmem:[%s3 + $0x5c] sm:$0xf]
        %v3050 = vld [vmem:[%s3 + $0x60] sm:$0xf]
        %v3051 = vld [vmem:[%s3 + $0x64] sm:$0xf]
        %v3052 = vld [vmem:[%s3 + $0x68] sm:$0xf]
        %v3053 = vld [vmem:[%s3 + $0x6c] sm:$0xf]
        %v3054 = vld [vmem:[%s3 + $0x70] sm:$0xf]
        %v3055 = vld [vmem:[%s3 + $0x74] sm:$0xf]
        %v3056 = vld [vmem:[%s3 + $0x78] sm:$0xf]
        %v3057 = vld [vmem:[%s3 + $0x7c] sm:$0xf]
        %v3058 = vld [vmem:[#allocation7] sm:$0x1]
        %v3060 = vlaneseq
        %v3061 = vshrl.u32 %v3060, 7
        %v3062 = vsub.s32 0, %v3061
        %v3063 = vrot.slane %v3058, %v3062
        %v3097 = vunpack.c.l.b16 %v3026
        %v3098 = vunpack.c.l.b16 %v3027
        %v3099 = vunpack.c.l.b16 %v3028
        %v3100 = vunpack.c.l.b16 %v3029
        %v3101 = vunpack.c.l.b16 %v3030
        %v3102 = vunpack.c.l.b16 %v3031
        %v3103 = vunpack.c.l.b16 %v3032
        %v3104 = vunpack.c.l.b16 %v3033
        %v3105 = vunpack.c.l.b16 %v3034
        %v3106 = vunpack.c.l.b16 %v3035
        %v3107 = vunpack.c.l.b16 %v3036
        %v3108 = vunpack.c.l.b16 %v3037
        %v3109 = vunpack.c.l.b16 %v3038
        %v3110 = vunpack.c.l.b16 %v3039
        %v3111 = vunpack.c.l.b16 %v3040
        %v3112 = vunpack.c.l.b16 %v3041
        %v3113 = vunpack.c.l.b16 %v3042
        %v3114 = vunpack.c.l.b16 %v3043
        %v3115 = vunpack.c.l.b16 %v3044
        %v3116 = vunpack.c.l.b16 %v3045
        %v3117 = vunpack.c.l.b16 %v3046
        %v3118 = vunpack.c.l.b16 %v3047
        %v3119 = vunpack.c.l.b16 %v3048
        %v3120 = vunpack.c.l.b16 %v3049
        %v3121 = vunpack.c.l.b16 %v3050
        %v3122 = vunpack.c.l.b16 %v3051
        %v3123 = vunpack.c.l.b16 %v3052
        %v3124 = vunpack.c.l.b16 %v3053
        %v3125 = vunpack.c.l.b16 %v3054
        %v3126 = vunpack.c.l.b16 %v3055
        %v3127 = vunpack.c.l.b16 %v3056
        %v3128 = vunpack.c.l.b16 %v3057
        %v3129 = vpack.c.b16 %v3098, %v3097
        %v3130 = vpack.c.b16 %v3100, %v3099
        %v3131 = vpack.c.b16 %v3102, %v3101
        %v3132 = vpack.c.b16 %v3104, %v3103
        %v3133 = vpack.c.b16 %v3106, %v3105
        %v3134 = vpack.c.b16 %v3108, %v3107
        %v3135 = vpack.c.b16 %v3110, %v3109
        %v3136 = vpack.c.b16 %v3112, %v3111
        %v3137 = vpack.c.b16 %v3114, %v3113
        %v3138 = vpack.c.b16 %v3116, %v3115
        %v3139 = vpack.c.b16 %v3118, %v3117
        %v3140 = vpack.c.b16 %v3120, %v3119
        %v3141 = vpack.c.b16 %v3122, %v3121
        %v3142 = vpack.c.b16 %v3124, %v3123
        %v3143 = vpack.c.b16 %v3126, %v3125
        %v3144 = vpack.c.b16 %v3128, %v3127
        %3161 = vmatprep.subr.bf16.mxu0 0
        %3162 = vmatpush1.bf16.msra.mxu0 %v3136
        %3163 = vmatprep.subr.bf16.mxu0 0
        %3164 = vmatpush1.bf16.msra.mxu0 %v3135
        %3165 = vmatprep.subr.bf16.mxu0 0
        %3166 = vmatpush1.bf16.msra.mxu0 %v3134
        %3167 = vmatprep.subr.bf16.mxu0 0
        %3168 = vmatpush1.bf16.msra.mxu0 %v3133
        %3169 = vmatprep.subr.bf16.mxu0 0
        %3170 = vmatpush1.bf16.msra.mxu0 %v3132
        %3171 = vmatprep.subr.bf16.mxu0 0
        %3172 = vmatpush1.bf16.msra.mxu0 %v3131
        %3173 = vmatprep.subr.bf16.mxu0 0
        %3174 = vmatpush1.bf16.msra.mxu0 %v3130
        %3175 = vmatprep.subr.bf16.mxu0 0
        %3176 = vmatpush1.bf16.msra.mxu0 %v3129
        %3177 = vmatprep.subr.bf16.mxu0 0
        %3178 = vmatpush2.bf16.msra.mxu0 %v3144
        %3179 = vmatprep.subr.bf16.mxu0 0
        %3180 = vmatpush2.bf16.msra.mxu0 %v3143
        %3181 = vmatprep.subr.bf16.mxu0 0
        %3182 = vmatpush2.bf16.msra.mxu0 %v3142
        %3183 = vmatprep.subr.bf16.mxu0 0
        %3184 = vmatpush2.bf16.msra.mxu0 %v3141
        %3185 = vmatprep.subr.bf16.mxu0 0
        %3186 = vmatpush2.bf16.msra.mxu0 %v3140
        %3187 = vmatprep.subr.bf16.mxu0 0
        %3188 = vmatpush2.bf16.msra.mxu0 %v3139
        %3189 = vmatprep.subr.bf16.mxu0 0
        %3190 = vmatpush2.bf16.msra.mxu0 %v3138
        %3191 = vmatprep.subr.bf16.mxu0 0
        %3192 = vmatpush2.bf16.msra.mxu0 %v3137
        %3193 = vmatprep.mubr.bf16.mxu0 %v3025
        %3194 = vmatmul.mubr.bf16.gmra.mxu0 %v3024
        %v3195 = vpop.f32.mrf.mxu0
        %v3196 = vadd.f32 %v3063, %v3195
        %v3197 = vpop.f32.mrf.mxu0
        %v3198 = vpop.f32.mrf.mxu0
        %v3199 = vpop.f32.mrf.mxu0
        %3200 = vdwg.mxu0
        %vm3201 = vcmask 31744
        %3202 = vst.msk [vmem:[%s280] sm:$0xff] %vm3201, %v3196
        %p3203 = scmp.lt.s32.totalorder %s21, 1
        %s3204 = scalar_select %p3203, %s21, 1
        %s3205 = smul.addr %s3204, 8
        %s3206 = scalar_lea.vmem %s5, %s3205
        // Predicated region
        $region57: #{tpu_custom_call.1} parent=39 // pred_check
          %p3207 = pneg %p149
        $region58: #{tpu_custom_call.1} parent=39 // pred_check_branch
          %3209 = sbr.rel (%p3207) target = $region60
        $region59: #{tpu_custom_call.1} parent=39 // pred_region
          _
        $region60: #{tpu_custom_call.1} parent=39 // pred_fallthru
          _
      $region40: #{tpu_custom_call.1} parent=5 // pred_fallthru
        _
      %p3210 = scmp.le.s32.totalorder 2, %s16
      // Predicated region
      $region61: #{tpu_custom_call.1} parent=5 // pred_check
        %p3211 = pneg %p3210
      $region62: #{tpu_custom_call.1} parent=5 // pred_check_branch
        %3213 = sbr.rel (%p3211) target = $region64
      $region63: #{tpu_custom_call.1} parent=5 // pred_region
        %s3214 = ssub.s32 %s16, 2
        // Predicated region
        $region65: #{tpu_custom_call.1} parent=63 // pred_check
          %p3215 = pneg %p155
        $region66: #{tpu_custom_call.1} parent=63 // pred_check_branch
          %3217 = sbr.rel (%p3215) target = $region68
        $region67: #{tpu_custom_call.1} parent=63 // pred_region
          %p3218 = scmp.lt.s32.totalorder %s22, 1
          %s3219 = scalar_select %p3218, %s22, 1
          %s3220 = smul.addr %s3219, 8
          %s3221 = scalar_lea.vmem %s5, %s3220
        $region68: #{tpu_custom_call.1} parent=63 // pred_fallthru
          _
      $region64: #{tpu_custom_call.1} parent=5 // pred_fallthru
        _
    $region6: #{tpu_custom_call.1} parent=1 // loop_footer
      %s20 = sadd.s32 1, %s16
    $region7: #{tpu_custom_call.1} parent=1 // loop_footer_branch
      %15 = sbr.rel target = $region3
    $region8: #{tpu_custom_call.1} parent=1 // loop_exit
      _
    %3222 = vsyncpa [#allocation3], 1
    %s3223 = scalar_lea.sflag [#allocation3], 1
    %3224 = vsyncpa %s3223, 1
    %3225 = vsyncpa [#allocation5], 1
    %3226 = vsyncpa [#allocation8], 1

</llo_original>
